<compile_context>
chip_gen: v6e
topology: v6e:2x2x1
jax: 0.10.0
libtpu: 0.0.40
codegen_flags: <defaults>
</compile_context>

<pallas_src>
import functools

import jax
import jax.numpy as jnp
from jax import lax
from jax.experimental import pallas as pl
from jax.experimental.pallas import tpu as pltpu

LEAKY_SLOPE = 0.01
BN_EPS = 1e-5


# ------------------------------ wrapper-side glue ------------------------------
def _upsample_linear_x2(x):
    """F.interpolate(x, scale_factor=2, mode='linear', align_corners=False); x: (B, C, L).

    out[2i]   = 0.75*x[i] + 0.25*x[i-1]   (edge-clamped)
    out[2i+1] = 0.75*x[i] + 0.25*x[i+1]   (edge-clamped)
    """
    B, C, L = x.shape
    left = jnp.concatenate([x[..., :1], x[..., :-1]], axis=-1)
    right = jnp.concatenate([x[..., 1:], x[..., -1:]], axis=-1)
    even = 0.75 * x + 0.25 * left
    odd = 0.75 * x + 0.25 * right
    return jnp.stack([even, odd], axis=-1).reshape(B, C, 2 * L)


# ------------------------------ shared conv tile --------------------------------
def _conv_tile(x2m_ref, x2h_ref, x1m_ref, x1h_ref, w2_ref, w1_ref, ksize, tl):
    """Valid conv over the concat(x2, x1) channels for one aligned time tile.

    x2m/x1m: (1, C, tl) bf16 main tile; x2h/x1h: (1, C, 128) bf16 lookahead halo
    (the 128 columns right after the tile).  w2/w1: (K, Cout, C) bf16.
    Returns (Cout, tl) f32: out[o, t] = sum_k sum_c w[o, c, k] * x[c, tile0 + t + k].
    """
    win2 = jnp.concatenate([x2m_ref[0], x2h_ref[0]], axis=-1)   # (C2, tl + 128), cheap:
    win1 = jnp.concatenate([x1m_ref[0], x1h_ref[0]], axis=-1)   # lane concat on a 128 boundary
    cout = w2_ref.shape[1]
    acc = jnp.zeros((cout, tl), jnp.float32)
    for k in range(ksize):                                       # K accumulated MXU matmuls,
        acc = acc + jnp.dot(w2_ref[k], win2[:, k:k + tl],        # no im2col temp, no channel
                            preferred_element_type=jnp.float32)  # concat ever materialized.
        acc = acc + jnp.dot(w1_ref[k], win1[:, k:k + tl],
                            preferred_element_type=jnp.float32)
    return acc


# ----------------------------------- kernels ------------------------------------
def _make_stats_kernel(tl, ksize, lout):
    """Pass 1: per-(batch, time-tile) BN partial statistics of the (bias-free) conv."""

    def kernel(x2m, x2h, x1m, x1h, w2, w1, stat_ref):
        j = pl.program_id(1)
        y = _conv_tile(x2m, x2h, x1m, x1h, w2, w1, ksize, tl)           # (Cout, tl) f32
        col = j * tl + lax.broadcasted_iota(jnp.int32, y.shape, 1)      # global output pos
        ym = jnp.where(col < lout, y, 0.0)                              # mask padded tail
        s = ym.sum(axis=1, keepdims=True)                               # (Cout, 1)
        ss = (ym * ym).sum(axis=1, keepdims=True)                       # (Cout, 1)
        stat_ref[0, 0] = jnp.concatenate([s, ss], axis=1)               # (Cout, 2)

    return kernel


def _make_output_kernel(tl, ksize):
    """Pass 2: recompute conv tile, apply folded BN affine + LeakyReLU, aligned write."""

    def kernel(x2m, x2h, x1m, x1h, w2, w1, scale_ref, shift_ref, o_ref):
        y = _conv_tile(x2m, x2h, x1m, x1h, w2, w1, ksize, tl)           # (Cout, tl) f32
        z = y * scale_ref[...] + shift_ref[...]
        o_ref[0] = jnp.where(z >= 0, z, LEAKY_SLOPE * z).astype(o_ref.dtype)

    return kernel


# ----------------------------------- wrapper -------------------------------------
def upsample_block(x1, x2, w, bias, gamma, beta, *, tl=2048):
    """x1: (B, C1, L1), x2: (B, C2, L2), w: (Cout, C2+C1, K) -- PyTorch NCL / OIK layouts.

    tl: time tile (multiple of 128).  For production channel counts on v7x (64 MiB VMEM)
    keep tl <= 2048; on v5e/v6e larger tiles are fine.
    """
    B, C1, L1 = x1.shape
    B2, C2, L2 = x2.shape
    Cout, Cin, K = w.shape
    assert Cin == C1 + C2 and B2 == B
    assert tl % 128 == 0 and K - 1 <= 128

    Lin = 2 * L1                       # upsampled length
    assert L2 >= Lin, "skip connection shorter than upsampled feature"
    Lout = Lin - K + 1
    assert Lout > 0

    nl = pl.cdiv(Lout, tl)             # number of aligned output time tiles
    hpb = tl // 128                    # halo blocks per tile
    ltot = nl * tl + 128               # main tiles + one 128-wide lookahead halo block

    # Fused single-materialization bf16 inputs (upsample/crop + zero-pad + cast each
    # lower to one XLA fusion); the zero pad makes every BlockSpec read in-bounds and
    # keeps out-of-range conv columns finite (they are masked from stats / output).
    x1u = _upsample_linear_x2(x1.astype(jnp.float32))                       # (B, C1, Lin)
    x1p = jnp.pad(x1u.astype(jnp.bfloat16), ((0, 0), (0, 0), (0, ltot - Lin)))
    lo = (L2 - Lin) // 2                                                    # center crop
    x2c = lax.slice_in_dim(x2, lo, lo + Lin, axis=2)
    x2p = jnp.pad(x2c.astype(jnp.bfloat16), ((0, 0), (0, 0), (0, ltot - Lin)))

    # Conv weight split by source (x2 channels first, per crop_and_concat), per-tap layout.
    w2 = jnp.transpose(w[:, :C2, :], (2, 0, 1)).astype(jnp.bfloat16)        # (K, Cout, C2)
    w1 = jnp.transpose(w[:, C2:, :], (2, 0, 1)).astype(jnp.bfloat16)        # (K, Cout, C1)

    main = lambda C: pl.BlockSpec((1, C, tl), lambda b, j: (b, 0, j))
    halo = lambda C: pl.BlockSpec((1, C, 128), lambda b, j: (b, 0, (j + 1) * hpb))
    wspec = lambda C: pl.BlockSpec((K, Cout, C), lambda b, j: (0, 0, 0))
    cparams = pltpu.CompilerParams(
        dimension_semantics=("parallel", "parallel"),   # no carries -> fully parallel grid
        vmem_limit_bytes=32 * 1024 * 1024)              # safe on v5e/v6e/v7x

    # ---- pass 1: conv per tile -> per-(batch, tile) BN partial sums / sums-of-squares ----
    stats = pl.pallas_call(
        _make_stats_kernel(tl, K, Lout),
        out_shape=jax.ShapeDtypeStruct((B, nl, Cout, 2), jnp.float32),
        grid=(B, nl),
        in_specs=[main(C2), halo(C2), main(C1), halo(C1), wspec(C2), wspec(C1)],
        out_specs=pl.BlockSpec((1, 1, Cout, 2), lambda b, j: (b, j, 0, 0)),
        compiler_params=cparams,
    )(x2p, x2p, x1p, x1p, w2, w1)

    # ---- fold conv bias + training-mode BatchNorm (biased var) into scale/shift ----
    n = float(B * Lout)
    ssum = stats.sum(axis=(0, 1))                                  # (Cout, 2)
    mean0 = ssum[:, 0] / n                                         # mean of bias-free conv
    var = jnp.maximum(ssum[:, 1] / n - mean0 * mean0, 0.0)         # clamp E[y^2]-E[y]^2 >= 0
    scale = gamma.astype(jnp.float32) * lax.rsqrt(var + BN_EPS)
    mean_y = mean0 + bias.astype(jnp.float32)                      # batch mean of conv + bias
    shift = beta.astype(jnp.float32) + (bias.astype(jnp.float32) - mean_y) * scale
    # (the conv bias cancels exactly under training-mode BN; computing stats without it
    #  also avoids the large-mean cancellation in the single-pass variance.)

    # ---- pass 2: recompute conv, apply folded BN affine + LeakyReLU, aligned output ----
    out = pl.pallas_call(
        _make_output_kernel(tl, K),
        out_shape=jax.ShapeDtypeStruct((B, Cout, Lout), jnp.float32),
        grid=(B, nl),
        in_specs=[main(C2), halo(C2), main(C1), halo(C1), wspec(C2), wspec(C1),
                  pl.BlockSpec((Cout, 1), lambda b, j: (0, 0)),
                  pl.BlockSpec((Cout, 1), lambda b, j: (0, 0))],
        out_specs=pl.BlockSpec((1, Cout, tl), lambda b, j: (b, 0, j)),  # partial last block
        compiler_params=cparams,
    )(x2p, x2p, x1p, x1p, w2, w1, scale.reshape(Cout, 1), shift.reshape(Cout, 1))
    return out


# ------------------------------ pure-JAX reference -------------------------------
def _reference(x1, x2, w, bias, gamma, beta):
    x1u = _upsample_linear_x2(x1)
    lin = x1u.shape[-1]
    lo = (x2.shape[2] - lin) // 2
    x2c = x2[:, :, lo:lo + lin]
    x = jnp.concatenate((x2c, x1u), axis=1)
    y = lax.conv_general_dilated(
        x, w, window_strides=(1,), padding='VALID',
        dimension_numbers=('NCH', 'OIH', 'NCH'),
        precision=lax.Precision.HIGHEST) + bias[None, :, None]
    mean = y.mean(axis=(0, 2), keepdims=True)
    var = ((y - mean) ** 2).mean(axis=(0, 2), keepdims=True)
    z = (y - mean) * lax.rsqrt(var + BN_EPS) * gamma[None, :, None] + beta[None, :, None]
    return jnp.where(z >= 0, z, LEAKY_SLOPE * z)


if __name__ == "__main__":
    B, C1, L1 = 2, 6, 80       # decoder feature: upsampled x2 -> length 160
    C2, L2 = 6, 170            # skip connection: center-cropped to length 160
    Cout, K = 8, 5

    key = jax.random.PRNGKey(0)
    k1, k2, kw, kb, kg, kbt = jax.random.split(key, 6)
    x1 = jax.random.normal(k1, (B, C1, L1), jnp.float32)
    x2 = jax.random.normal(k2, (B, C2, L2), jnp.float32)
    w = jax.random.normal(kw, (Cout, C1 + C2, K), jnp.float32) * 0.1   # Conv1d weight (OIK)
    bias = jax.random.normal(kb, (Cout,), jnp.float32) * 0.1           # Conv1d bias
    gamma = 0.5 + jax.random.uniform(kg, (Cout,), jnp.float32)         # BN weight
    beta = jax.random.normal(kbt, (Cout,), jnp.float32) * 0.1          # BN bias

    # tl=128 so the small demo exercises multiple time tiles, the lookahead-halo blocks
    # and the masked partial last output block.
    fn = jax.jit(functools.partial(upsample_block, tl=128))
    out = jax.block_until_ready(fn(x1, x2, w, bias, gamma, beta))

    ref = jax.block_until_ready(_reference(x1, x2, w, bias, gamma, beta))
    Lout = 2 * L1 - (K - 1)
    assert out.shape == (B, Cout, Lout), out.shape
    err = float(jnp.max(jnp.abs(out - ref)))
    # bf16 MXU inputs (f32 accumulation) vs the f32 HIGHEST reference -> loose-ish tolerance.
    assert jnp.allclose(out, ref, rtol=2e-2, atol=2e-2), err
    print("KERNEL_OK")
</pallas_src>

<mosaic_0001>
module attributes {stable_mosaic.version = 11 : i64} {
  func.func @kernel(%arg0: i32, %arg1: i32, %arg2: memref<1x6x128xbf16, #tpu.memory_space<vmem>>, %arg3: memref<1x6x128xbf16, #tpu.memory_space<vmem>>, %arg4: memref<1x6x128xbf16, #tpu.memory_space<vmem>>, %arg5: memref<1x6x128xbf16, #tpu.memory_space<vmem>>, %arg6: memref<5x8x6xbf16, #tpu.memory_space<vmem>>, %arg7: memref<5x8x6xbf16, #tpu.memory_space<vmem>>, %arg8: memref<1x1x8x2xf32, #tpu.memory_space<vmem>>) attributes {dimension_semantics = [#tpu.dimension_semantics<parallel>, #tpu.dimension_semantics<parallel>], iteration_bounds = array<i64: 2, 2>, scalar_prefetch = 0 : i64, scratch_operands = 0 : i64, tpu.core_type = #tpu.core_type<tc>, window_params = [{transform_indices = @transform_0, window_bounds = array<i64: 1, 6, 128>}, {transform_indices = @transform_1, window_bounds = array<i64: 1, 6, 128>}, {transform_indices = @transform_2, window_bounds = array<i64: 1, 6, 128>}, {transform_indices = @transform_3, window_bounds = array<i64: 1, 6, 128>}, {pipeline_mode = #tpu.pipeline_mode<synchronous>, transform_indices = @transform_4, window_bounds = array<i64: 5, 8, 6>}, {pipeline_mode = #tpu.pipeline_mode<synchronous>, transform_indices = @transform_5, window_bounds = array<i64: 5, 8, 6>}, {transform_indices = @transform_6, window_bounds = array<i64: 1, 1, 8, 2>}]} {
    %c0 = arith.constant 0 : index
    %c0_0 = arith.constant 0 : index
    %c0_1 = arith.constant 0 : index
    %0 = vector.load %arg2[%c0, %c0_0, %c0_1] : memref<1x6x128xbf16, #tpu.memory_space<vmem>>, vector<1x6x128xbf16>
    %1 = vector.shape_cast %0 : vector<1x6x128xbf16> to vector<6x128xbf16>
    %c0_2 = arith.constant 0 : index
    %c0_3 = arith.constant 0 : index
    %c0_4 = arith.constant 0 : index
    %2 = vector.load %arg3[%c0_2, %c0_3, %c0_4] : memref<1x6x128xbf16, #tpu.memory_space<vmem>>, vector<1x6x128xbf16>
    %3 = vector.shape_cast %2 : vector<1x6x128xbf16> to vector<6x128xbf16>
    %4 = tpu.concatenate %1, %3 in 1 : vector<6x128xbf16>, vector<6x128xbf16> -> vector<6x256xbf16>
    %c0_5 = arith.constant 0 : index
    %c0_6 = arith.constant 0 : index
    %c0_7 = arith.constant 0 : index
    %5 = vector.load %arg4[%c0_5, %c0_6, %c0_7] : memref<1x6x128xbf16, #tpu.memory_space<vmem>>, vector<1x6x128xbf16>
    %6 = vector.shape_cast %5 : vector<1x6x128xbf16> to vector<6x128xbf16>
    %c0_8 = arith.constant 0 : index
    %c0_9 = arith.constant 0 : index
    %c0_10 = arith.constant 0 : index
    %7 = vector.load %arg5[%c0_8, %c0_9, %c0_10] : memref<1x6x128xbf16, #tpu.memory_space<vmem>>, vector<1x6x128xbf16>
    %8 = vector.shape_cast %7 : vector<1x6x128xbf16> to vector<6x128xbf16>
    %9 = tpu.concatenate %6, %8 in 1 : vector<6x128xbf16>, vector<6x128xbf16> -> vector<6x256xbf16>
    %cst = arith.constant 0.000000e+00 : f32
    %10 = vector.broadcast %cst : f32 to vector<8x128xf32>
    %c0_11 = arith.constant 0 : index
    %c0_12 = arith.constant 0 : index
    %c0_13 = arith.constant 0 : index
    %11 = vector.load %arg6[%c0_11, %c0_12, %c0_13] : memref<5x8x6xbf16, #tpu.memory_space<vmem>>, vector<1x8x6xbf16>
    %12 = vector.shape_cast %11 : vector<1x8x6xbf16> to vector<8x6xbf16>
    %13 = vector.extract_strided_slice %4 {offsets = [0, 0], sizes = [6, 128], strides = [1, 1]} : vector<6x256xbf16> to vector<6x128xbf16>
    %cst_14 = arith.constant dense<0.000000e+00> : vector<8x128xf32>
    %14 = tpu.matmul %12, %13, %cst_14 {dimension_numbers = #tpu.dot_dimension_numbers<[1], [0], [0], [1], [0, 0, 1, 1], [], []>} : vector<8x6xbf16>, vector<6x128xbf16>, vector<8x128xf32> -> vector<8x128xf32>
    %15 = arith.addf %10, %14 : vector<8x128xf32>
    %c0_15 = arith.constant 0 : index
    %c0_16 = arith.constant 0 : index
    %c0_17 = arith.constant 0 : index
    %16 = vector.load %arg7[%c0_15, %c0_16, %c0_17] : memref<5x8x6xbf16, #tpu.memory_space<vmem>>, vector<1x8x6xbf16>
    %17 = vector.shape_cast %16 : vector<1x8x6xbf16> to vector<8x6xbf16>
    %18 = vector.extract_strided_slice %9 {offsets = [0, 0], sizes = [6, 128], strides = [1, 1]} : vector<6x256xbf16> to vector<6x128xbf16>
    %cst_18 = arith.constant dense<0.000000e+00> : vector<8x128xf32>
    %19 = tpu.matmul %17, %18, %cst_18 {dimension_numbers = #tpu.dot_dimension_numbers<[1], [0], [0], [1], [0, 0, 1, 1], [], []>} : vector<8x6xbf16>, vector<6x128xbf16>, vector<8x128xf32> -> vector<8x128xf32>
    %20 = arith.addf %15, %19 : vector<8x128xf32>
    %c1 = arith.constant 1 : index
    %c0_19 = arith.constant 0 : index
    %c0_20 = arith.constant 0 : index
    %21 = vector.load %arg6[%c1, %c0_19, %c0_20] : memref<5x8x6xbf16, #tpu.memory_space<vmem>>, vector<1x8x6xbf16>
    %22 = vector.shape_cast %21 : vector<1x8x6xbf16> to vector<8x6xbf16>
    %23 = vector.extract_strided_slice %4 {offsets = [0, 1], sizes = [6, 128], strides = [1, 1]} : vector<6x256xbf16> to vector<6x128xbf16>
    %cst_21 = arith.constant dense<0.000000e+00> : vector<8x128xf32>
    %24 = tpu.matmul %22, %23, %cst_21 {dimension_numbers = #tpu.dot_dimension_numbers<[1], [0], [0], [1], [0, 0, 1, 1], [], []>} : vector<8x6xbf16>, vector<6x128xbf16>, vector<8x128xf32> -> vector<8x128xf32>
    %25 = arith.addf %20, %24 : vector<8x128xf32>
    %c1_22 = arith.constant 1 : index
    %c0_23 = arith.constant 0 : index
    %c0_24 = arith.constant 0 : index
    %26 = vector.load %arg7[%c1_22, %c0_23, %c0_24] : memref<5x8x6xbf16, #tpu.memory_space<vmem>>, vector<1x8x6xbf16>
    %27 = vector.shape_cast %26 : vector<1x8x6xbf16> to vector<8x6xbf16>
    %28 = vector.extract_strided_slice %9 {offsets = [0, 1], sizes = [6, 128], strides = [1, 1]} : vector<6x256xbf16> to vector<6x128xbf16>
    %cst_25 = arith.constant dense<0.000000e+00> : vector<8x128xf32>
    %29 = tpu.matmul %27, %28, %cst_25 {dimension_numbers = #tpu.dot_dimension_numbers<[1], [0], [0], [1], [0, 0, 1, 1], [], []>} : vector<8x6xbf16>, vector<6x128xbf16>, vector<8x128xf32> -> vector<8x128xf32>
    %30 = arith.addf %25, %29 : vector<8x128xf32>
    %c2 = arith.constant 2 : index
    %c0_26 = arith.constant 0 : index
    %c0_27 = arith.constant 0 : index
    %31 = vector.load %arg6[%c2, %c0_26, %c0_27] : memref<5x8x6xbf16, #tpu.memory_space<vmem>>, vector<1x8x6xbf16>
    %32 = vector.shape_cast %31 : vector<1x8x6xbf16> to vector<8x6xbf16>
    %33 = vector.extract_strided_slice %4 {offsets = [0, 2], sizes = [6, 128], strides = [1, 1]} : vector<6x256xbf16> to vector<6x128xbf16>
    %cst_28 = arith.constant dense<0.000000e+00> : vector<8x128xf32>
    %34 = tpu.matmul %32, %33, %cst_28 {dimension_numbers = #tpu.dot_dimension_numbers<[1], [0], [0], [1], [0, 0, 1, 1], [], []>} : vector<8x6xbf16>, vector<6x128xbf16>, vector<8x128xf32> -> vector<8x128xf32>
    %35 = arith.addf %30, %34 : vector<8x128xf32>
    %c2_29 = arith.constant 2 : index
    %c0_30 = arith.constant 0 : index
    %c0_31 = arith.constant 0 : index
    %36 = vector.load %arg7[%c2_29, %c0_30, %c0_31] : memref<5x8x6xbf16, #tpu.memory_space<vmem>>, vector<1x8x6xbf16>
    %37 = vector.shape_cast %36 : vector<1x8x6xbf16> to vector<8x6xbf16>
    %38 = vector.extract_strided_slice %9 {offsets = [0, 2], sizes = [6, 128], strides = [1, 1]} : vector<6x256xbf16> to vector<6x128xbf16>
    %cst_32 = arith.constant dense<0.000000e+00> : vector<8x128xf32>
    %39 = tpu.matmul %37, %38, %cst_32 {dimension_numbers = #tpu.dot_dimension_numbers<[1], [0], [0], [1], [0, 0, 1, 1], [], []>} : vector<8x6xbf16>, vector<6x128xbf16>, vector<8x128xf32> -> vector<8x128xf32>
    %40 = arith.addf %35, %39 : vector<8x128xf32>
    %c3 = arith.constant 3 : index
    %c0_33 = arith.constant 0 : index
    %c0_34 = arith.constant 0 : index
    %41 = vector.load %arg6[%c3, %c0_33, %c0_34] : memref<5x8x6xbf16, #tpu.memory_space<vmem>>, vector<1x8x6xbf16>
    %42 = vector.shape_cast %41 : vector<1x8x6xbf16> to vector<8x6xbf16>
    %43 = vector.extract_strided_slice %4 {offsets = [0, 3], sizes = [6, 128], strides = [1, 1]} : vector<6x256xbf16> to vector<6x128xbf16>
    %cst_35 = arith.constant dense<0.000000e+00> : vector<8x128xf32>
    %44 = tpu.matmul %42, %43, %cst_35 {dimension_numbers = #tpu.dot_dimension_numbers<[1], [0], [0], [1], [0, 0, 1, 1], [], []>} : vector<8x6xbf16>, vector<6x128xbf16>, vector<8x128xf32> -> vector<8x128xf32>
    %45 = arith.addf %40, %44 : vector<8x128xf32>
    %c3_36 = arith.constant 3 : index
    %c0_37 = arith.constant 0 : index
    %c0_38 = arith.constant 0 : index
    %46 = vector.load %arg7[%c3_36, %c0_37, %c0_38] : memref<5x8x6xbf16, #tpu.memory_space<vmem>>, vector<1x8x6xbf16>
    %47 = vector.shape_cast %46 : vector<1x8x6xbf16> to vector<8x6xbf16>
    %48 = vector.extract_strided_slice %9 {offsets = [0, 3], sizes = [6, 128], strides = [1, 1]} : vector<6x256xbf16> to vector<6x128xbf16>
    %cst_39 = arith.constant dense<0.000000e+00> : vector<8x128xf32>
    %49 = tpu.matmul %47, %48, %cst_39 {dimension_numbers = #tpu.dot_dimension_numbers<[1], [0], [0], [1], [0, 0, 1, 1], [], []>} : vector<8x6xbf16>, vector<6x128xbf16>, vector<8x128xf32> -> vector<8x128xf32>
    %50 = arith.addf %45, %49 : vector<8x128xf32>
    %c4 = arith.constant 4 : index
    %c0_40 = arith.constant 0 : index
    %c0_41 = arith.constant 0 : index
    %51 = vector.load %arg6[%c4, %c0_40, %c0_41] : memref<5x8x6xbf16, #tpu.memory_space<vmem>>, vector<1x8x6xbf16>
    %52 = vector.shape_cast %51 : vector<1x8x6xbf16> to vector<8x6xbf16>
    %53 = vector.extract_strided_slice %4 {offsets = [0, 4], sizes = [6, 128], strides = [1, 1]} : vector<6x256xbf16> to vector<6x128xbf16>
    %cst_42 = arith.constant dense<0.000000e+00> : vector<8x128xf32>
    %54 = tpu.matmul %52, %53, %cst_42 {dimension_numbers = #tpu.dot_dimension_numbers<[1], [0], [0], [1], [0, 0, 1, 1], [], []>} : vector<8x6xbf16>, vector<6x128xbf16>, vector<8x128xf32> -> vector<8x128xf32>
    %55 = arith.addf %50, %54 : vector<8x128xf32>
    %c4_43 = arith.constant 4 : index
    %c0_44 = arith.constant 0 : index
    %c0_45 = arith.constant 0 : index
    %56 = vector.load %arg7[%c4_43, %c0_44, %c0_45] : memref<5x8x6xbf16, #tpu.memory_space<vmem>>, vector<1x8x6xbf16>
    %57 = vector.shape_cast %56 : vector<1x8x6xbf16> to vector<8x6xbf16>
    %58 = vector.extract_strided_slice %9 {offsets = [0, 4], sizes = [6, 128], strides = [1, 1]} : vector<6x256xbf16> to vector<6x128xbf16>
    %cst_46 = arith.constant dense<0.000000e+00> : vector<8x128xf32>
    %59 = tpu.matmul %57, %58, %cst_46 {dimension_numbers = #tpu.dot_dimension_numbers<[1], [0], [0], [1], [0, 0, 1, 1], [], []>} : vector<8x6xbf16>, vector<6x128xbf16>, vector<8x128xf32> -> vector<8x128xf32>
    %60 = arith.addf %55, %59 : vector<8x128xf32>
    %c128_i32 = arith.constant 128 : i32
    %61 = arith.muli %arg1, %c128_i32 : i32
    %62 = tpu.iota {dimensions = array<i32: 1>} : vector<8x128xi32>
    %63 = vector.broadcast %61 : i32 to vector<8x128xi32>
    %64 = arith.addi %63, %62 : vector<8x128xi32>
    %c156_i32 = arith.constant 156 : i32
    %65 = vector.broadcast %c156_i32 : i32 to vector<8x128xi32>
    %66 = arith.cmpi slt, %64, %65 : vector<8x128xi32>
    %cst_47 = arith.constant 0.000000e+00 : f32
    %67 = vector.broadcast %cst_47 : f32 to vector<8x128xf32>
    %68 = arith.select %66, %60, %67 : vector<8x128xi1>, vector<8x128xf32>
    %cst_48 = arith.constant dense<0.000000e+00> : vector<8xf32>
    %69 = vector.multi_reduction <add>, %68, %cst_48 [1] : vector<8x128xf32> to vector<8xf32>
    %70 = vector.shape_cast %69 : vector<8xf32> to vector<8x1xf32>
    %71 = arith.mulf %68, %68 : vector<8x128xf32>
    %cst_49 = arith.constant dense<0.000000e+00> : vector<8xf32>
    %72 = vector.multi_reduction <add>, %71, %cst_49 [1] : vector<8x128xf32> to vector<8xf32>
    %73 = vector.shape_cast %72 : vector<8xf32> to vector<8x1xf32>
    %74 = tpu.concatenate %70, %73 in 1 : vector<8x1xf32>, vector<8x1xf32> -> vector<8x2xf32>
    %c0_50 = arith.constant 0 : index
    %c0_51 = arith.constant 0 : index
    %c0_52 = arith.constant 0 : index
    %c0_53 = arith.constant 0 : index
    %75 = vector.load %arg8[%c0_50, %c0_51, %c0_52, %c0_53] : memref<1x1x8x2xf32, #tpu.memory_space<vmem>>, vector<1x1x8x2xf32>
    %76 = vector.shape_cast %75 : vector<1x1x8x2xf32> to vector<8x2xf32>
    %77 = vector.shape_cast %74 : vector<8x2xf32> to vector<1x1x8x2xf32>
    tpu.vector_store %arg8[%c0_50, %c0_51, %c0_52, %c0_53], %77 {strides = array<i32>} : memref<1x1x8x2xf32, #tpu.memory_space<vmem>>, vector<1x1x8x2xf32>,
    return
  }
  func.func @transform_0(%arg0: i32, %arg1: i32) -> (i32, i32, i32) {
    %c0_i32 = arith.constant 0 : i32
    %c0_i32_0 = arith.constant 0 : i32
    return %arg0, %c0_i32, %arg1 : i32, i32, i32
  }
  func.func @transform_1(%arg0: i32, %arg1: i32) -> (i32, i32, i32) {
    %c1_i32 = arith.constant 1 : i32
    %0 = arith.addi %arg1, %c1_i32 : i32
    %c1_i32_0 = arith.constant 1 : i32
    %1 = arith.muli %0, %c1_i32_0 : i32
    %c0_i32 = arith.constant 0 : i32
    %c0_i32_1 = arith.constant 0 : i32
    return %arg0, %c0_i32, %1 : i32, i32, i32
  }
  func.func @transform_2(%arg0: i32, %arg1: i32) -> (i32, i32, i32) {
    %c0_i32 = arith.constant 0 : i32
    %c0_i32_0 = arith.constant 0 : i32
    return %arg0, %c0_i32, %arg1 : i32, i32, i32
  }
  func.func @transform_3(%arg0: i32, %arg1: i32) -> (i32, i32, i32) {
    %c1_i32 = arith.constant 1 : i32
    %0 = arith.addi %arg1, %c1_i32 : i32
    %c1_i32_0 = arith.constant 1 : i32
    %1 = arith.muli %0, %c1_i32_0 : i32
    %c0_i32 = arith.constant 0 : i32
    %c0_i32_1 = arith.constant 0 : i32
    return %arg0, %c0_i32, %1 : i32, i32, i32
  }
  func.func @transform_4(%arg0: i32, %arg1: i32) -> (i32, i32, i32) {
    %c0_i32 = arith.constant 0 : i32
    %c0_i32_0 = arith.constant 0 : i32
    %c0_i32_1 = arith.constant 0 : i32
    %c0_i32_2 = arith.constant 0 : i32
    return %c0_i32, %c0_i32_0, %c0_i32_1 : i32, i32, i32
  }
  func.func @transform_5(%arg0: i32, %arg1: i32) -> (i32, i32, i32) {
    %c0_i32 = arith.constant 0 : i32
    %c0_i32_0 = arith.constant 0 : i32
    %c0_i32_1 = arith.constant 0 : i32
    %c0_i32_2 = arith.constant 0 : i32
    return %c0_i32, %c0_i32_0, %c0_i32_1 : i32, i32, i32
  }
  func.func @transform_6(%arg0: i32, %arg1: i32) -> (i32, i32, i32, i32) {
    %c0_i32 = arith.constant 0 : i32
    %c0_i32_0 = arith.constant 0 : i32
    %c0_i32_1 = arith.constant 0 : i32
    return %arg0, %arg1, %c0_i32, %c0_i32_0 : i32, i32, i32, i32
  }
}

module attributes {stable_mosaic.version = 11 : i64} {
  func.func @kernel(%arg0: i32, %arg1: i32, %arg2: memref<1x6x128xbf16, #tpu.memory_space<vmem>>, %arg3: memref<1x6x128xbf16, #tpu.memory_space<vmem>>, %arg4: memref<1x6x128xbf16, #tpu.memory_space<vmem>>, %arg5: memref<1x6x128xbf16, #tpu.memory_space<vmem>>, %arg6: memref<5x8x6xbf16, #tpu.memory_space<vmem>>, %arg7: memref<5x8x6xbf16, #tpu.memory_space<vmem>>, %arg8: memref<8x1xf32, #tpu.memory_space<vmem>>, %arg9: memref<8x1xf32, #tpu.memory_space<vmem>>, %arg10: memref<1x8x128xf32, #tpu.memory_space<vmem>>) attributes {dimension_semantics = [#tpu.dimension_semantics<parallel>, #tpu.dimension_semantics<parallel>], iteration_bounds = array<i64: 2, 2>, scalar_prefetch = 0 : i64, scratch_operands = 0 : i64, tpu.core_type = #tpu.core_type<tc>, window_params = [{transform_indices = @transform_0, window_bounds = array<i64: 1, 6, 128>}, {transform_indices = @transform_1, window_bounds = array<i64: 1, 6, 128>}, {transform_indices = @transform_2, window_bounds = array<i64: 1, 6, 128>}, {transform_indices = @transform_3, window_bounds = array<i64: 1, 6, 128>}, {pipeline_mode = #tpu.pipeline_mode<synchronous>, transform_indices = @transform_4, window_bounds = array<i64: 5, 8, 6>}, {pipeline_mode = #tpu.pipeline_mode<synchronous>, transform_indices = @transform_5, window_bounds = array<i64: 5, 8, 6>}, {pipeline_mode = #tpu.pipeline_mode<synchronous>, transform_indices = @transform_6, window_bounds = array<i64: 8, 1>}, {pipeline_mode = #tpu.pipeline_mode<synchronous>, transform_indices = @transform_7, window_bounds = array<i64: 8, 1>}, {transform_indices = @transform_8, window_bounds = array<i64: 1, 8, 128>}]} {
    %c0 = arith.constant 0 : index
    %c0_0 = arith.constant 0 : index
    %c0_1 = arith.constant 0 : index
    %0 = vector.load %arg2[%c0, %c0_0, %c0_1] : memref<1x6x128xbf16, #tpu.memory_space<vmem>>, vector<1x6x128xbf16>
    %1 = vector.shape_cast %0 : vector<1x6x128xbf16> to vector<6x128xbf16>
    %c0_2 = arith.constant 0 : index
    %c0_3 = arith.constant 0 : index
    %c0_4 = arith.constant 0 : index
    %2 = vector.load %arg3[%c0_2, %c0_3, %c0_4] : memref<1x6x128xbf16, #tpu.memory_space<vmem>>, vector<1x6x128xbf16>
    %3 = vector.shape_cast %2 : vector<1x6x128xbf16> to vector<6x128xbf16>
    %4 = tpu.concatenate %1, %3 in 1 : vector<6x128xbf16>, vector<6x128xbf16> -> vector<6x256xbf16>
    %c0_5 = arith.constant 0 : index
    %c0_6 = arith.constant 0 : index
    %c0_7 = arith.constant 0 : index
    %5 = vector.load %arg4[%c0_5, %c0_6, %c0_7] : memref<1x6x128xbf16, #tpu.memory_space<vmem>>, vector<1x6x128xbf16>
    %6 = vector.shape_cast %5 : vector<1x6x128xbf16> to vector<6x128xbf16>
    %c0_8 = arith.constant 0 : index
    %c0_9 = arith.constant 0 : index
    %c0_10 = arith.constant 0 : index
    %7 = vector.load %arg5[%c0_8, %c0_9, %c0_10] : memref<1x6x128xbf16, #tpu.memory_space<vmem>>, vector<1x6x128xbf16>
    %8 = vector.shape_cast %7 : vector<1x6x128xbf16> to vector<6x128xbf16>
    %9 = tpu.concatenate %6, %8 in 1 : vector<6x128xbf16>, vector<6x128xbf16> -> vector<6x256xbf16>
    %cst = arith.constant 0.000000e+00 : f32
    %10 = vector.broadcast %cst : f32 to vector<8x128xf32>
    %c0_11 = arith.constant 0 : index
    %c0_12 = arith.constant 0 : index
    %c0_13 = arith.constant 0 : index
    %11 = vector.load %arg6[%c0_11, %c0_12, %c0_13] : memref<5x8x6xbf16, #tpu.memory_space<vmem>>, vector<1x8x6xbf16>
    %12 = vector.shape_cast %11 : vector<1x8x6xbf16> to vector<8x6xbf16>
    %13 = vector.extract_strided_slice %4 {offsets = [0, 0], sizes = [6, 128], strides = [1, 1]} : vector<6x256xbf16> to vector<6x128xbf16>
    %cst_14 = arith.constant dense<0.000000e+00> : vector<8x128xf32>
    %14 = tpu.matmul %12, %13, %cst_14 {dimension_numbers = #tpu.dot_dimension_numbers<[1], [0], [0], [1], [0, 0, 1, 1], [], []>} : vector<8x6xbf16>, vector<6x128xbf16>, vector<8x128xf32> -> vector<8x128xf32>
    %15 = arith.addf %10, %14 : vector<8x128xf32>
    %c0_15 = arith.constant 0 : index
    %c0_16 = arith.constant 0 : index
    %c0_17 = arith.constant 0 : index
    %16 = vector.load %arg7[%c0_15, %c0_16, %c0_17] : memref<5x8x6xbf16, #tpu.memory_space<vmem>>, vector<1x8x6xbf16>
    %17 = vector.shape_cast %16 : vector<1x8x6xbf16> to vector<8x6xbf16>
    %18 = vector.extract_strided_slice %9 {offsets = [0, 0], sizes = [6, 128], strides = [1, 1]} : vector<6x256xbf16> to vector<6x128xbf16>
    %cst_18 = arith.constant dense<0.000000e+00> : vector<8x128xf32>
    %19 = tpu.matmul %17, %18, %cst_18 {dimension_numbers = #tpu.dot_dimension_numbers<[1], [0], [0], [1], [0, 0, 1, 1], [], []>} : vector<8x6xbf16>, vector<6x128xbf16>, vector<8x128xf32> -> vector<8x128xf32>
    %20 = arith.addf %15, %19 : vector<8x128xf32>
    %c1 = arith.constant 1 : index
    %c0_19 = arith.constant 0 : index
    %c0_20 = arith.constant 0 : index
    %21 = vector.load %arg6[%c1, %c0_19, %c0_20] : memref<5x8x6xbf16, #tpu.memory_space<vmem>>, vector<1x8x6xbf16>
    %22 = vector.shape_cast %21 : vector<1x8x6xbf16> to vector<8x6xbf16>
    %23 = vector.extract_strided_slice %4 {offsets = [0, 1], sizes = [6, 128], strides = [1, 1]} : vector<6x256xbf16> to vector<6x128xbf16>
    %cst_21 = arith.constant dense<0.000000e+00> : vector<8x128xf32>
    %24 = tpu.matmul %22, %23, %cst_21 {dimension_numbers = #tpu.dot_dimension_numbers<[1], [0], [0], [1], [0, 0, 1, 1], [], []>} : vector<8x6xbf16>, vector<6x128xbf16>, vector<8x128xf32> -> vector<8x128xf32>
    %25 = arith.addf %20, %24 : vector<8x128xf32>
    %c1_22 = arith.constant 1 : index
    %c0_23 = arith.constant 0 : index
    %c0_24 = arith.constant 0 : index
    %26 = vector.load %arg7[%c1_22, %c0_23, %c0_24] : memref<5x8x6xbf16, #tpu.memory_space<vmem>>, vector<1x8x6xbf16>
    %27 = vector.shape_cast %26 : vector<1x8x6xbf16> to vector<8x6xbf16>
    %28 = vector.extract_strided_slice %9 {offsets = [0, 1], sizes = [6, 128], strides = [1, 1]} : vector<6x256xbf16> to vector<6x128xbf16>
    %cst_25 = arith.constant dense<0.000000e+00> : vector<8x128xf32>
    %29 = tpu.matmul %27, %28, %cst_25 {dimension_numbers = #tpu.dot_dimension_numbers<[1], [0], [0], [1], [0, 0, 1, 1], [], []>} : vector<8x6xbf16>, vector<6x128xbf16>, vector<8x128xf32> -> vector<8x128xf32>
    %30 = arith.addf %25, %29 : vector<8x128xf32>
    %c2 = arith.constant 2 : index
    %c0_26 = arith.constant 0 : index
    %c0_27 = arith.constant 0 : index
    %31 = vector.load %arg6[%c2, %c0_26, %c0_27] : memref<5x8x6xbf16, #tpu.memory_space<vmem>>, vector<1x8x6xbf16>
    %32 = vector.shape_cast %31 : vector<1x8x6xbf16> to vector<8x6xbf16>
    %33 = vector.extract_strided_slice %4 {offsets = [0, 2], sizes = [6, 128], strides = [1, 1]} : vector<6x256xbf16> to vector<6x128xbf16>
    %cst_28 = arith.constant dense<0.000000e+00> : vector<8x128xf32>
    %34 = tpu.matmul %32, %33, %cst_28 {dimension_numbers = #tpu.dot_dimension_numbers<[1], [0], [0], [1], [0, 0, 1, 1], [], []>} : vector<8x6xbf16>, vector<6x128xbf16>, vector<8x128xf32> -> vector<8x128xf32>
    %35 = arith.addf %30, %34 : vector<8x128xf32>
    %c2_29 = arith.constant 2 : index
    %c0_30 = arith.constant 0 : index
    %c0_31 = arith.constant 0 : index
    %36 = vector.load %arg7[%c2_29, %c0_30, %c0_31] : memref<5x8x6xbf16, #tpu.memory_space<vmem>>, vector<1x8x6xbf16>
    %37 = vector.shape_cast %36 : vector<1x8x6xbf16> to vector<8x6xbf16>
    %38 = vector.extract_strided_slice %9 {offsets = [0, 2], sizes = [6, 128], strides = [1, 1]} : vector<6x256xbf16> to vector<6x128xbf16>
    %cst_32 = arith.constant dense<0.000000e+00> : vector<8x128xf32>
    %39 = tpu.matmul %37, %38, %cst_32 {dimension_numbers = #tpu.dot_dimension_numbers<[1], [0], [0], [1], [0, 0, 1, 1], [], []>} : vector<8x6xbf16>, vector<6x128xbf16>, vector<8x128xf32> -> vector<8x128xf32>
    %40 = arith.addf %35, %39 : vector<8x128xf32>
    %c3 = arith.constant 3 : index
    %c0_33 = arith.constant 0 : index
    %c0_34 = arith.constant 0 : index
    %41 = vector.load %arg6[%c3, %c0_33, %c0_34] : memref<5x8x6xbf16, #tpu.memory_space<vmem>>, vector<1x8x6xbf16>
    %42 = vector.shape_cast %41 : vector<1x8x6xbf16> to vector<8x6xbf16>
    %43 = vector.extract_strided_slice %4 {offsets = [0, 3], sizes = [6, 128], strides = [1, 1]} : vector<6x256xbf16> to vector<6x128xbf16>
    %cst_35 = arith.constant dense<0.000000e+00> : vector<8x128xf32>
    %44 = tpu.matmul %42, %43, %cst_35 {dimension_numbers = #tpu.dot_dimension_numbers<[1], [0], [0], [1], [0, 0, 1, 1], [], []>} : vector<8x6xbf16>, vector<6x128xbf16>, vector<8x128xf32> -> vector<8x128xf32>
    %45 = arith.addf %40, %44 : vector<8x128xf32>
    %c3_36 = arith.constant 3 : index
    %c0_37 = arith.constant 0 : index
    %c0_38 = arith.constant 0 : index
    %46 = vector.load %arg7[%c3_36, %c0_37, %c0_38] : memref<5x8x6xbf16, #tpu.memory_space<vmem>>, vector<1x8x6xbf16>
    %47 = vector.shape_cast %46 : vector<1x8x6xbf16> to vector<8x6xbf16>
    %48 = vector.extract_strided_slice %9 {offsets = [0, 3], sizes = [6, 128], strides = [1, 1]} : vector<6x256xbf16> to vector<6x128xbf16>
    %cst_39 = arith.constant dense<0.000000e+00> : vector<8x128xf32>
    %49 = tpu.matmul %47, %48, %cst_39 {dimension_numbers = #tpu.dot_dimension_numbers<[1], [0], [0], [1], [0, 0, 1, 1], [], []>} : vector<8x6xbf16>, vector<6x128xbf16>, vector<8x128xf32> -> vector<8x128xf32>
    %50 = arith.addf %45, %49 : vector<8x128xf32>
    %c4 = arith.constant 4 : index
    %c0_40 = arith.constant 0 : index
    %c0_41 = arith.constant 0 : index
    %51 = vector.load %arg6[%c4, %c0_40, %c0_41] : memref<5x8x6xbf16, #tpu.memory_space<vmem>>, vector<1x8x6xbf16>
    %52 = vector.shape_cast %51 : vector<1x8x6xbf16> to vector<8x6xbf16>
    %53 = vector.extract_strided_slice %4 {offsets = [0, 4], sizes = [6, 128], strides = [1, 1]} : vector<6x256xbf16> to vector<6x128xbf16>
    %cst_42 = arith.constant dense<0.000000e+00> : vector<8x128xf32>
    %54 = tpu.matmul %52, %53, %cst_42 {dimension_numbers = #tpu.dot_dimension_numbers<[1], [0], [0], [1], [0, 0, 1, 1], [], []>} : vector<8x6xbf16>, vector<6x128xbf16>, vector<8x128xf32> -> vector<8x128xf32>
    %55 = arith.addf %50, %54 : vector<8x128xf32>
    %c4_43 = arith.constant 4 : index
    %c0_44 = arith.constant 0 : index
    %c0_45 = arith.constant 0 : index
    %56 = vector.load %arg7[%c4_43, %c0_44, %c0_45] : memref<5x8x6xbf16, #tpu.memory_space<vmem>>, vector<1x8x6xbf16>
    %57 = vector.shape_cast %56 : vector<1x8x6xbf16> to vector<8x6xbf16>
    %58 = vector.extract_strided_slice %9 {offsets = [0, 4], sizes = [6, 128], strides = [1, 1]} : vector<6x256xbf16> to vector<6x128xbf16>
    %cst_46 = arith.constant dense<0.000000e+00> : vector<8x128xf32>
    %59 = tpu.matmul %57, %58, %cst_46 {dimension_numbers = #tpu.dot_dimension_numbers<[1], [0], [0], [1], [0, 0, 1, 1], [], []>} : vector<8x6xbf16>, vector<6x128xbf16>, vector<8x128xf32> -> vector<8x128xf32>
    %60 = arith.addf %55, %59 : vector<8x128xf32>
    %c0_47 = arith.constant 0 : index
    %c0_48 = arith.constant 0 : index
    %61 = vector.load %arg8[%c0_47, %c0_48] : memref<8x1xf32, #tpu.memory_space<vmem>>, vector<8x1xf32>
    %62 = vector.broadcast %61 : vector<8x1xf32> to vector<8x128xf32>
    %63 = arith.mulf %60, %62 : vector<8x128xf32>
    %c0_49 = arith.constant 0 : index
    %c0_50 = arith.constant 0 : index
    %64 = vector.load %arg9[%c0_49, %c0_50] : memref<8x1xf32, #tpu.memory_space<vmem>>, vector<8x1xf32>
    %65 = vector.broadcast %64 : vector<8x1xf32> to vector<8x128xf32>
    %66 = arith.addf %63, %65 : vector<8x128xf32>
    %cst_51 = arith.constant 0.000000e+00 : f32
    %67 = vector.broadcast %cst_51 : f32 to vector<8x128xf32>
    %68 = arith.cmpf oge, %66, %67 : vector<8x128xf32>
    %cst_52 = arith.constant 0.00999999977 : f32
    %69 = vector.broadcast %cst_52 : f32 to vector<8x128xf32>
    %70 = arith.mulf %69, %66 : vector<8x128xf32>
    %71 = arith.select %68, %66, %70 : vector<8x128xi1>, vector<8x128xf32>
    %c0_53 = arith.constant 0 : index
    %c0_54 = arith.constant 0 : index
    %c0_55 = arith.constant 0 : index
    %72 = vector.load %arg10[%c0_53, %c0_54, %c0_55] : memref<1x8x128xf32, #tpu.memory_space<vmem>>, vector<1x8x128xf32>
    %73 = vector.shape_cast %72 : vector<1x8x128xf32> to vector<8x128xf32>
    %74 = vector.shape_cast %71 : vector<8x128xf32> to vector<1x8x128xf32>
    tpu.vector_store %arg10[%c0_53, %c0_54, %c0_55], %74 {strides = array<i32>} : memref<1x8x128xf32, #tpu.memory_space<vmem>>, vector<1x8x128xf32>,
    return
  }
  func.func @transform_0(%arg0: i32, %arg1: i32) -> (i32, i32, i32) {
    %c0_i32 = arith.constant 0 : i32
    %c0_i32_0 = arith.constant 0 : i32
    return %arg0, %c0_i32, %arg1 : i32, i32, i32
  }
  func.func @transform_1(%arg0: i32, %arg1: i32) -> (i32, i32, i32) {
    %c1_i32 = arith.constant 1 : i32
    %0 = arith.addi %arg1, %c1_i32 : i32
    %c1_i32_0 = arith.constant 1 : i32
    %1 = arith.muli %0, %c1_i32_0 : i32
    %c0_i32 = arith.constant 0 : i32
    %c0_i32_1 = arith.constant 0 : i32
    return %arg0, %c0_i32, %1 : i32, i32, i32
  }
  func.func @transform_2(%arg0: i32, %arg1: i32) -> (i32, i32, i32) {
    %c0_i32 = arith.constant 0 : i32
    %c0_i32_0 = arith.constant 0 : i32
    return %arg0, %c0_i32, %arg1 : i32, i32, i32
  }
  func.func @transform_3(%arg0: i32, %arg1: i32) -> (i32, i32, i32) {
    %c1_i32 = arith.constant 1 : i32
    %0 = arith.addi %arg1, %c1_i32 : i32
    %c1_i32_0 = arith.constant 1 : i32
    %1 = arith.muli %0, %c1_i32_0 : i32
    %c0_i32 = arith.constant 0 : i32
    %c0_i32_1 = arith.constant 0 : i32
    return %arg0, %c0_i32, %1 : i32, i32, i32
  }
  func.func @transform_4(%arg0: i32, %arg1: i32) -> (i32, i32, i32) {
    %c0_i32 = arith.constant 0 : i32
    %c0_i32_0 = arith.constant 0 : i32
    %c0_i32_1 = arith.constant 0 : i32
    %c0_i32_2 = arith.constant 0 : i32
    return %c0_i32, %c0_i32_0, %c0_i32_1 : i32, i32, i32
  }
  func.func @transform_5(%arg0: i32, %arg1: i32) -> (i32, i32, i32) {
    %c0_i32 = arith.constant 0 : i32
    %c0_i32_0 = arith.constant 0 : i32
    %c0_i32_1 = arith.constant 0 : i32
    %c0_i32_2 = arith.constant 0 : i32
    return %c0_i32, %c0_i32_0, %c0_i32_1 : i32, i32, i32
  }
  func.func @transform_6(%arg0: i32, %arg1: i32) -> (i32, i32) {
    %c0_i32 = arith.constant 0 : i32
    %c0_i32_0 = arith.constant 0 : i32
    %c0_i32_1 = arith.constant 0 : i32
    return %c0_i32, %c0_i32_0 : i32, i32
  }
  func.func @transform_7(%arg0: i32, %arg1: i32) -> (i32, i32) {
    %c0_i32 = arith.constant 0 : i32
    %c0_i32_0 = arith.constant 0 : i32
    %c0_i32_1 = arith.constant 0 : i32
    return %c0_i32, %c0_i32_0 : i32, i32
  }
  func.func @transform_8(%arg0: i32, %arg1: i32) -> (i32, i32, i32) {
    %c0_i32 = arith.constant 0 : i32
    %c0_i32_0 = arith.constant 0 : i32
    return %arg0, %c0_i32, %arg1 : i32, i32, i32
  }
}

</mosaic_0001>

<llo_original>
// kernel: upsample_block.3
$region0: #{upsample_block.3}
  #allocation0 [shape = 'u32[]', space=smem, size = 0x4, offset = 0x4, fixed_abs, tag = 'smem constant byte address 0x4 - core index']
  #allocation1 [shape = 'u32[144,128]{1,0:T(1,128)}', space=vmem, size = 0x12000, scoped, tag = 'internal scratch']
  %s0 = inlined_call_operand.vmem [shape: bf16[2,6,384], index: 0, kind: input, shape index: {}, may-alias: {0,1}]
  %s1 = inlined_call_operand.vmem [shape: bf16[2,6,384], index: 1, kind: input, shape index: {}, may-alias: {0,1}]
  %s2 = inlined_call_operand.vmem [shape: bf16[2,6,384], index: 2, kind: input, shape index: {}, may-alias: {2,3}]
  %s3 = inlined_call_operand.vmem [shape: bf16[2,6,384], index: 3, kind: input, shape index: {}, may-alias: {2,3}]
  %s4 = inlined_call_operand.vmem [shape: bf16[5,8,6], index: 4, kind: input, shape index: {}]
  %s5 = inlined_call_operand.vmem [shape: bf16[5,8,6], index: 5, kind: input, shape index: {}]
  %s6 = inlined_call_operand.vmem [shape: f32[8,1], index: 6, kind: input, shape index: {}]
  %s7 = inlined_call_operand.vmem [shape: f32[8,1], index: 7, kind: input, shape index: {}]
  %s8 = inlined_call_operand.hbm [shape: f32[2,8,156], index: 8, kind: output, shape index: {}]
  %s9 = sld [smem:[#allocation0]]
  $region65: #{upsample_block.3} parent=0
    _
  %s11 = ssub.s32 1, %s9
  %s12 = scalar_select 0, %s11, %s9
  $region1: #{upsample_block.3} parent=0
    #allocation2 [shape = 'u8[8192]{0}', space=vmem, size = 0x2000, scoped, tag = 'output window, operand 0']
    #allocation3 [shape = 's32[2]{0}', space=sflag, size = 0x8, scoped, tag = 'scoped memory for upsample_block.3']
    %13 = vsyncpa [#allocation3], 0
    %s14 = scalar_lea.sflag [#allocation3], 1
    %15 = vsyncpa %s14, 0
    loop: start=0, step=1, limit=6
    $region2: #{upsample_block.3} parent=1 // loop_pre_header
      _
    $region3: #{upsample_block.3} parent=1 // loop_header
      %s17 = sphi 0, %s21
      %p18 = scmp.ge.s32.totalorder %s17, 6
      %s24 = sphi 0, %s36
      %s25 = sphi 0, %s32
      %s26 = sphi 0, %s24
      %s27 = sphi 0, %s25
      %s28 = sphi 0, %s26
      %s29 = sphi 0, %s27
      %s41 = sphi 0, %s43
      %s44 = sphi 0, %s41
      %s45 = sphi 0, %s44
      %s61 = sphi 0, %s45
      %s71 = sphi 0, %s73
      %s74 = sphi 0, %s71
      %s75 = sphi 0, %s74
      %s91 = sphi 0, %s75
      %s99 = sphi 0, %s101
      %s102 = sphi 0, %s99
      %s103 = sphi 0, %s102
      %s119 = sphi 0, %s103
      %s129 = sphi 0, %s131
      %s132 = sphi 0, %s129
      %s133 = sphi 0, %s132
      %s149 = sphi 0, %s133
      %s153 = sphi 0, %s153
      %s155 = sphi 0, %s153
      %s156 = sphi 0, %s155
      %s170 = sphi 0, %s156
      %s174 = sphi 0, %s174
      %s176 = sphi 0, %s174
      %s177 = sphi 0, %s176
      %s191 = sphi 0, %s177
      %s195 = sphi 0, %s195
      %s197 = sphi 0, %s195
      %s198 = sphi 0, %s197
      %s212 = sphi 0, %s198
      %s216 = sphi 0, %s216
      %s218 = sphi 0, %s216
      %s219 = sphi 0, %s218
      %s233 = sphi 0, %s219
      %s241 = sphi 0, %s243
      %s244 = sphi 0, %s241
      %s245 = sphi 0, %s244
      %s261 = sphi 0, %s245
    $region4: #{upsample_block.3} parent=1 // loop_header_branch
      %20 = sbr.rel (%p18) target = $region8
    $region5: #{upsample_block.3} parent=1 // loop_body
      %s22 = ssub.s32 %s17, 1
      %s23 = ssub.s32 %s17, 2
      %s30 = sadd.s32 1, %s25
      %p31 = scmp.ge.s32.totalorder %s30, 2
      %s32 = scalar_select %p31, 0, %s30
      %s33 = sadd.s32 1, %s24
      %s34 = scalar_select %p31, %s33, %s24
      %p35 = scmp.ge.s32.totalorder %s34, 2
      %s36 = scalar_select %p35, 0, %s34
      %s37 = ssub.s32 %s24, %s36
      %s38 = ssub.s32 %s25, %s32
      %s39 = sor.u32 %s37, %s38
      %p40 = scmp.eq.s32.totalorder %s39, 0
      %s42 = sadd.s32 %s41, 1
      %s43 = scalar_select %p40, %s41, %s42
      %p46 = pneg %p40
      %p47 = scmp.eq.s32.totalorder %s17, 3
      %p48 = por %p46, %p47
      %p49 = scmp.ne.s32.totalorder %s41, %s44
      %p50 = scmp.eq.s32.totalorder %s17, 0
      %p51 = por %p49, %p50
      %p52 = scmp.ne.s32.totalorder %s41, %s44
      %p53 = scmp.eq.s32.totalorder %s22, 3
      %p54 = por %p52, %p53
      %p55 = scmp.ne.s32.totalorder %s44, %s45
      %p56 = scmp.eq.s32.totalorder %s22, 0
      %p57 = por %p55, %p56
      %p58 = scmp.ne.s32.totalorder %s44, %s45
      %p59 = scmp.eq.s32.totalorder %s23, 3
      %p60 = por %p58, %p59
      %p62 = scmp.ne.s32.totalorder %s45, %s61
      %p63 = scmp.eq.s32.totalorder %s23, 0
      %p64 = por %p62, %p63
      %s65 = sadd.s32 %s25, 1
      %s66 = sadd.s32 %s32, 1
      %s67 = ssub.s32 %s24, %s36
      %s68 = ssub.s32 %s65, %s66
      %s69 = sor.u32 %s67, %s68
      %p70 = scmp.eq.s32.totalorder %s69, 0
      %s72 = sadd.s32 %s71, 1
      %s73 = scalar_select %p70, %s71, %s72
      %p76 = pneg %p70
      %p77 = scmp.eq.s32.totalorder %s17, 3
      %p78 = por %p76, %p77
      %p79 = scmp.ne.s32.totalorder %s71, %s74
      %p80 = scmp.eq.s32.totalorder %s17, 0
      %p81 = por %p79, %p80
      %p82 = scmp.ne.s32.totalorder %s71, %s74
      %p83 = scmp.eq.s32.totalorder %s22, 3
      %p84 = por %p82, %p83
      %p85 = scmp.ne.s32.totalorder %s74, %s75
      %p86 = scmp.eq.s32.totalorder %s22, 0
      %p87 = por %p85, %p86
      %p88 = scmp.ne.s32.totalorder %s74, %s75
      %p89 = scmp.eq.s32.totalorder %s23, 3
      %p90 = por %p88, %p89
      %p92 = scmp.ne.s32.totalorder %s75, %s91
      %p93 = scmp.eq.s32.totalorder %s23, 0
      %p94 = por %p92, %p93
      %s95 = ssub.s32 %s24, %s36
      %s96 = ssub.s32 %s25, %s32
      %s97 = sor.u32 %s95, %s96
      %p98 = scmp.eq.s32.totalorder %s97, 0
      %s100 = sadd.s32 %s99, 1
      %s101 = scalar_select %p98, %s99, %s100
      %p104 = pneg %p98
      %p105 = scmp.eq.s32.totalorder %s17, 3
      %p106 = por %p104, %p105
      %p107 = scmp.ne.s32.totalorder %s99, %s102
      %p108 = scmp.eq.s32.totalorder %s17, 0
      %p109 = por %p107, %p108
      %p110 = scmp.ne.s32.totalorder %s99, %s102
      %p111 = scmp.eq.s32.totalorder %s22, 3
      %p112 = por %p110, %p111
      %p113 = scmp.ne.s32.totalorder %s102, %s103
      %p114 = scmp.eq.s32.totalorder %s22, 0
      %p115 = por %p113, %p114
      %p116 = scmp.ne.s32.totalorder %s102, %s103
      %p117 = scmp.eq.s32.totalorder %s23, 3
      %p118 = por %p116, %p117
      %p120 = scmp.ne.s32.totalorder %s103, %s119
      %p121 = scmp.eq.s32.totalorder %s23, 0
      %p122 = por %p120, %p121
      %s123 = sadd.s32 %s25, 1
      %s124 = sadd.s32 %s32, 1
      %s125 = ssub.s32 %s24, %s36
      %s126 = ssub.s32 %s123, %s124
      %s127 = sor.u32 %s125, %s126
      %p128 = scmp.eq.s32.totalorder %s127, 0
      %s130 = sadd.s32 %s129, 1
      %s131 = scalar_select %p128, %s129, %s130
      %p134 = pneg %p128
      %p135 = scmp.eq.s32.totalorder %s17, 3
      %p136 = por %p134, %p135
      %p137 = scmp.ne.s32.totalorder %s129, %s132
      %p138 = scmp.eq.s32.totalorder %s17, 0
      %p139 = por %p137, %p138
      %p140 = scmp.ne.s32.totalorder %s129, %s132
      %p141 = scmp.eq.s32.totalorder %s22, 3
      %p142 = por %p140, %p141
      %p143 = scmp.ne.s32.totalorder %s132, %s133
      %p144 = scmp.eq.s32.totalorder %s22, 0
      %p145 = por %p143, %p144
      %p146 = scmp.ne.s32.totalorder %s132, %s133
      %p147 = scmp.eq.s32.totalorder %s23, 3
      %p148 = por %p146, %p147
      %p150 = scmp.ne.s32.totalorder %s133, %s149
      %p151 = scmp.eq.s32.totalorder %s23, 0
      %p152 = por %p150, %p151
      %s154 = sadd.s32 %s153, 1
      %p157 = scmp.eq.s32.totalorder %s17, 3
      %p158 = scmp.ne.s32.totalorder %s153, %s155
      %p159 = scmp.eq.s32.totalorder %s17, 0
      %p160 = por %p158, %p159
      %p161 = scmp.ne.s32.totalorder %s153, %s155
      %p162 = scmp.eq.s32.totalorder %s22, 3
      %p163 = por %p161, %p162
      %p164 = scmp.ne.s32.totalorder %s155, %s156
      %p165 = scmp.eq.s32.totalorder %s22, 0
      %p166 = por %p164, %p165
      %p167 = scmp.ne.s32.totalorder %s155, %s156
      %p168 = scmp.eq.s32.totalorder %s23, 3
      %p169 = por %p167, %p168
      %p171 = scmp.ne.s32.totalorder %s156, %s170
      %p172 = scmp.eq.s32.totalorder %s23, 0
      %p173 = por %p171, %p172
      %s175 = sadd.s32 %s174, 1
      %p178 = scmp.eq.s32.totalorder %s17, 3
      %p179 = scmp.ne.s32.totalorder %s174, %s176
      %p180 = scmp.eq.s32.totalorder %s17, 0
      %p181 = por %p179, %p180
      %p182 = scmp.ne.s32.totalorder %s174, %s176
      %p183 = scmp.eq.s32.totalorder %s22, 3
      %p184 = por %p182, %p183
      %p185 = scmp.ne.s32.totalorder %s176, %s177
      %p186 = scmp.eq.s32.totalorder %s22, 0
      %p187 = por %p185, %p186
      %p188 = scmp.ne.s32.totalorder %s176, %s177
      %p189 = scmp.eq.s32.totalorder %s23, 3
      %p190 = por %p188, %p189
      %p192 = scmp.ne.s32.totalorder %s177, %s191
      %p193 = scmp.eq.s32.totalorder %s23, 0
      %p194 = por %p192, %p193
      %s196 = sadd.s32 %s195, 1
      %p199 = scmp.eq.s32.totalorder %s17, 3
      %p200 = scmp.ne.s32.totalorder %s195, %s197
      %p201 = scmp.eq.s32.totalorder %s17, 0
      %p202 = por %p200, %p201
      %p203 = scmp.ne.s32.totalorder %s195, %s197
      %p204 = scmp.eq.s32.totalorder %s22, 3
      %p205 = por %p203, %p204
      %p206 = scmp.ne.s32.totalorder %s197, %s198
      %p207 = scmp.eq.s32.totalorder %s22, 0
      %p208 = por %p206, %p207
      %p209 = scmp.ne.s32.totalorder %s197, %s198
      %p210 = scmp.eq.s32.totalorder %s23, 3
      %p211 = por %p209, %p210
      %p213 = scmp.ne.s32.totalorder %s198, %s212
      %p214 = scmp.eq.s32.totalorder %s23, 0
      %p215 = por %p213, %p214
      %s217 = sadd.s32 %s216, 1
      %p220 = scmp.eq.s32.totalorder %s17, 3
      %p221 = scmp.ne.s32.totalorder %s216, %s218
      %p222 = scmp.eq.s32.totalorder %s17, 0
      %p223 = por %p221, %p222
      %p224 = scmp.ne.s32.totalorder %s216, %s218
      %p225 = scmp.eq.s32.totalorder %s22, 3
      %p226 = por %p224, %p225
      %p227 = scmp.ne.s32.totalorder %s218, %s219
      %p228 = scmp.eq.s32.totalorder %s22, 0
      %p229 = por %p227, %p228
      %p230 = scmp.ne.s32.totalorder %s218, %s219
      %p231 = scmp.eq.s32.totalorder %s23, 3
      %p232 = por %p230, %p231
      %p234 = scmp.ne.s32.totalorder %s219, %s233
      %p235 = scmp.eq.s32.totalorder %s23, 0
      %p236 = por %p234, %p235
      %s237 = ssub.s32 %s24, %s36
      %s238 = ssub.s32 %s25, %s32
      %s239 = sor.u32 %s237, %s238
      %p240 = scmp.eq.s32.totalorder %s239, 0
      %s242 = sadd.s32 %s241, 1
      %s243 = scalar_select %p240, %s241, %s242
      %p246 = pneg %p240
      %p247 = scmp.eq.s32.totalorder %s17, 3
      %p248 = por %p246, %p247
      %p249 = scmp.ne.s32.totalorder %s241, %s244
      %p250 = scmp.eq.s32.totalorder %s17, 0
      %p251 = por %p249, %p250
      %p252 = scmp.ne.s32.totalorder %s241, %s244
      %p253 = scmp.eq.s32.totalorder %s22, 3
      %p254 = por %p252, %p253
      %p255 = scmp.ne.s32.totalorder %s244, %s245
      %p256 = scmp.eq.s32.totalorder %s22, 0
      %p257 = por %p255, %p256
      %p258 = scmp.ne.s32.totalorder %s244, %s245
      %p259 = scmp.eq.s32.totalorder %s23, 3
      %p260 = por %p258, %p259
      %p262 = scmp.ne.s32.totalorder %s245, %s261
      %p263 = scmp.eq.s32.totalorder %s23, 0
      %p264 = por %p262, %p263
      %p265 = scmp.le.s32.totalorder 1, %s17
      %p266 = scmp.lt.s32.totalorder %s17, 5
      %p267 = pnand %p265, %p266
      %p268 = pneg %p267
      // Predicated region
      $region9: #{upsample_block.3} parent=5 // pred_check
        _
      $region10: #{upsample_block.3} parent=5 // pred_check_branch
        %270 = sbr.rel (%p267) target = $region12
      $region11: #{upsample_block.3} parent=5 // pred_region
        %s271 = ssub.s32 %s17, 1
        // Predicated region
        $region13: #{upsample_block.3} parent=11 // pred_check
          %p272 = pneg %p166
        $region14: #{upsample_block.3} parent=11 // pred_check_branch
          %274 = sbr.rel (%p272) target = $region16
        $region15: #{upsample_block.3} parent=11 // pred_region
          _
        $region16: #{upsample_block.3} parent=11 // pred_fallthru
          _
        // Predicated region
        $region17: #{upsample_block.3} parent=11 // pred_check
          %p275 = pneg %p187
        $region18: #{upsample_block.3} parent=11 // pred_check_branch
          %277 = sbr.rel (%p275) target = $region20
        $region19: #{upsample_block.3} parent=11 // pred_region
          _
        $region20: #{upsample_block.3} parent=11 // pred_fallthru
          _
        // Predicated region
        $region21: #{upsample_block.3} parent=11 // pred_check
          %p278 = pneg %p208
        $region22: #{upsample_block.3} parent=11 // pred_check_branch
          %280 = sbr.rel (%p278) target = $region24
        $region23: #{upsample_block.3} parent=11 // pred_region
          _
        $region24: #{upsample_block.3} parent=11 // pred_fallthru
          _
        // Predicated region
        $region25: #{upsample_block.3} parent=11 // pred_check
          %p281 = pneg %p229
        $region26: #{upsample_block.3} parent=11 // pred_check_branch
          %283 = sbr.rel (%p281) target = $region28
        $region27: #{upsample_block.3} parent=11 // pred_region
          _
        $region28: #{upsample_block.3} parent=11 // pred_fallthru
          _
      $region12: #{upsample_block.3} parent=5 // pred_fallthru
        _
      %p284 = scmp.lt.s32.totalorder %s17, 4
      // Predicated region
      $region29: #{upsample_block.3} parent=5 // pred_check
        %p285 = pneg %p284
      $region30: #{upsample_block.3} parent=5 // pred_check_branch
        %287 = sbr.rel (%p285) target = $region32
      $region31: #{upsample_block.3} parent=5 // pred_region
        // Predicated region
        $region33: #{upsample_block.3} parent=31 // pred_check
          %p288 = pneg %p51
        $region34: #{upsample_block.3} parent=31 // pred_check_branch
          %290 = sbr.rel (%p288) target = $region36
        $region35: #{upsample_block.3} parent=31 // pred_region
          %p291 = scmp.lt.s32.totalorder %s24, 1
          %s292 = scalar_select %p291, %s24, 1
          %p293 = scmp.lt.s32.totalorder %s25, 2
          %s294 = scalar_select %p293, %s25, 2
          %s295 = smul.addr %s292, 3
          %s296 = sadd.s32 %s294, %s295
          %s297 = smul.addr %s296, 4
          %s298 = scalar_lea.vmem %s0, %s297
        $region36: #{upsample_block.3} parent=31 // pred_fallthru
          _
        // Predicated region
        $region37: #{upsample_block.3} parent=31 // pred_check
          %p299 = pneg %p81
        $region38: #{upsample_block.3} parent=31 // pred_check_branch
          %301 = sbr.rel (%p299) target = $region40
        $region39: #{upsample_block.3} parent=31 // pred_region
          %s302 = sadd.s32 %s25, 1
          %p303 = scmp.lt.s32.totalorder %s24, 1
          %s304 = scalar_select %p303, %s24, 1
          %p305 = scmp.lt.s32.totalorder %s302, 2
          %s306 = scalar_select %p305, %s302, 2
          %s307 = smul.addr %s304, 3
          %s308 = sadd.s32 %s306, %s307
          %s309 = smul.addr %s308, 4
          %s310 = scalar_lea.vmem %s1, %s309
          %s311 = sadd.s32 %s25, 1
        $region40: #{upsample_block.3} parent=31 // pred_fallthru
          _
        // Predicated region
        $region41: #{upsample_block.3} parent=31 // pred_check
          %p312 = pneg %p109
        $region42: #{upsample_block.3} parent=31 // pred_check_branch
          %314 = sbr.rel (%p312) target = $region44
        $region43: #{upsample_block.3} parent=31 // pred_region
          %p315 = scmp.lt.s32.totalorder %s24, 1
          %s316 = scalar_select %p315, %s24, 1
          %p317 = scmp.lt.s32.totalorder %s25, 2
          %s318 = scalar_select %p317, %s25, 2
          %s319 = smul.addr %s316, 3
          %s320 = sadd.s32 %s318, %s319
          %s321 = smul.addr %s320, 4
          %s322 = scalar_lea.vmem %s2, %s321
        $region44: #{upsample_block.3} parent=31 // pred_fallthru
          _
        // Predicated region
        $region45: #{upsample_block.3} parent=31 // pred_check
          %p323 = pneg %p139
        $region46: #{upsample_block.3} parent=31 // pred_check_branch
          %325 = sbr.rel (%p323) target = $region48
        $region47: #{upsample_block.3} parent=31 // pred_region
          %s326 = sadd.s32 %s25, 1
          %p327 = scmp.lt.s32.totalorder %s24, 1
          %s328 = scalar_select %p327, %s24, 1
          %p329 = scmp.lt.s32.totalorder %s326, 2
          %s330 = scalar_select %p329, %s326, 2
          %s331 = smul.addr %s328, 3
          %s332 = sadd.s32 %s330, %s331
          %s333 = smul.addr %s332, 4
          %s334 = scalar_lea.vmem %s3, %s333
          %s335 = sadd.s32 %s25, 1
        $region48: #{upsample_block.3} parent=31 // pred_fallthru
          _
      $region32: #{upsample_block.3} parent=5 // pred_fallthru
        _
      %p336 = scmp.le.s32.totalorder 1, %s17
      %p337 = scmp.lt.s32.totalorder %s17, 5
      %p338 = pnand %p336, %p337
      %p339 = pneg %p338
      // Predicated region
      $region49: #{upsample_block.3} parent=5 // pred_check
        _
      $region50: #{upsample_block.3} parent=5 // pred_check_branch
        %341 = sbr.rel (%p338) target = $region52
      $region51: #{upsample_block.3} parent=5 // pred_region
        %s342 = ssub.s32 %s17, 1
        %p343 = scmp.lt.s32.totalorder %s26, 1
        %s344 = scalar_select %p343, %s26, 1
        %p345 = scmp.lt.s32.totalorder %s27, 2
        %s346 = scalar_select %p345, %s27, 2
        %s347 = smul.addr %s344, 3
        %s348 = sadd.s32 %s346, %s347
        %s349 = smul.addr %s348, 4
        %s350 = scalar_lea.vmem %s0, %s349
        %p351 = pneg %p57
        %p352 = pneg %p54
        %s353 = sadd.s32 %s27, 1
        %p354 = scmp.lt.s32.totalorder %s26, 1
        %s355 = scalar_select %p354, %s26, 1
        %p356 = scmp.lt.s32.totalorder %s353, 2
        %s357 = scalar_select %p356, %s353, 2
        %s358 = smul.addr %s355, 3
        %s359 = sadd.s32 %s357, %s358
        %s360 = smul.addr %s359, 4
        %s361 = scalar_lea.vmem %s1, %s360
        %p362 = pneg %p87
        %p363 = pneg %p84
        %p364 = scmp.lt.s32.totalorder %s26, 1
        %s365 = scalar_select %p364, %s26, 1
        %p366 = scmp.lt.s32.totalorder %s27, 2
        %s367 = scalar_select %p366, %s27, 2
        %s368 = smul.addr %s365, 3
        %s369 = sadd.s32 %s367, %s368
        %s370 = smul.addr %s369, 4
        %s371 = scalar_lea.vmem %s2, %s370
        %p372 = pneg %p115
        %p373 = pneg %p112
        %s374 = sadd.s32 %s27, 1
        %p375 = scmp.lt.s32.totalorder %s26, 1
        %s376 = scalar_select %p375, %s26, 1
        %p377 = scmp.lt.s32.totalorder %s374, 2
        %s378 = scalar_select %p377, %s374, 2
        %s379 = smul.addr %s376, 3
        %s380 = sadd.s32 %s378, %s379
        %s381 = smul.addr %s380, 4
        %s382 = scalar_lea.vmem %s3, %s381
        %p383 = pneg %p145
        %p384 = pneg %p142
        %p385 = pneg %p166
        %p386 = pneg %p163
        %p387 = pneg %p187
        %p388 = pneg %p184
        %p389 = pneg %p208
        %p390 = pneg %p205
        %p391 = pneg %p229
        %p392 = pneg %p226
        %p393 = pneg %p257
        %p394 = pneg %p254
        %s395 = sand.u32 %s244, 1
        %s396 = scalar_lea.sflag [#allocation3], %s395
        %s397 = sand.u32 %s244, 1
        %s398 = smul.addr %s397, 8
        %s399 = scalar_lea.vmem [#allocation2], %s398
        %p400 = scmp.lt.s32.totalorder %s26, 1
        %s401 = scalar_select %p400, %s26, 1
        %p402 = scmp.lt.s32.totalorder %s27, 2
        %s403 = scalar_select %p402, %s27, 2
        %s404 = smul.addr %s401, 3
        %s405 = sadd.s32 %s403, %s404
        %s406 = smul.addr %s405, 4
        %s407 = scalar_lea.vmem %s0, %s406
        %s408 = sadd.s32 %s27, 1
        %p409 = scmp.lt.s32.totalorder %s26, 1
        %s410 = scalar_select %p409, %s26, 1
        %p411 = scmp.lt.s32.totalorder %s408, 2
        %s412 = scalar_select %p411, %s408, 2
        %s413 = smul.addr %s410, 3
        %s414 = sadd.s32 %s412, %s413
        %s415 = smul.addr %s414, 4
        %s416 = scalar_lea.vmem %s1, %s415
        %s417 = sadd.s32 %s27, 1
        %p418 = scmp.lt.s32.totalorder %s26, 1
        %s419 = scalar_select %p418, %s26, 1
        %p420 = scmp.lt.s32.totalorder %s27, 2
        %s421 = scalar_select %p420, %s27, 2
        %s422 = smul.addr %s419, 3
        %s423 = sadd.s32 %s421, %s422
        %s424 = smul.addr %s423, 4
        %s425 = scalar_lea.vmem %s2, %s424
        %s426 = sadd.s32 %s27, 1
        %p427 = scmp.lt.s32.totalorder %s26, 1
        %s428 = scalar_select %p427, %s26, 1
        %p429 = scmp.lt.s32.totalorder %s426, 2
        %s430 = scalar_select %p429, %s426, 2
        %s431 = smul.addr %s428, 3
        %s432 = sadd.s32 %s430, %s431
        %s433 = smul.addr %s432, 4
        %s434 = scalar_lea.vmem %s3, %s433
        %s435 = sadd.s32 %s27, 1
        %v437 = vld [vmem:[%s407] sm:$0x7]
        %v438 = vld [vmem:[%s416] sm:$0x7]
        %v439 = vld [vmem:[%s425] sm:$0x7]
        %v440 = vld [vmem:[%s434] sm:$0x7]
        %v441 = vld [vmem:[%s4] sm:$0xf]
        %v442 = vld [vmem:[%s5] sm:$0xf]
        %vm443 = vcmask 48128
        %v445 = vsel %vm443, %v442, 0
        %vm447 = vcmask 1042432
        %v449 = vsel %vm447, %v439, 0
        %451 = vmatprep.subr.bf16.mxu0 0
        %452 = vmatpush1.bf16.msra.mxu0 0
        %453 = vmatprep.subr.bf16.mxu0 0
        %454 = vmatpush1.bf16.msra.mxu0 0
        %455 = vmatprep.subr.bf16.mxu0 0
        %456 = vmatpush1.bf16.msra.mxu0 0
        %457 = vmatprep.subr.bf16.mxu0 0
        %458 = vmatpush1.bf16.msra.mxu0 0
        %459 = vmatprep.subr.bf16.mxu0 0
        %460 = vmatpush1.bf16.msra.mxu0 0
        %461 = vmatprep.subr.bf16.mxu0 0
        %462 = vmatpush1.bf16.msra.mxu0 0
        %463 = vmatprep.subr.bf16.mxu0 0
        %464 = vmatpush1.bf16.msra.mxu0 0
        %465 = vmatprep.subr.bf16.mxu0 0
        %466 = vmatpush1.bf16.msra.mxu0 %v449
        %467 = vmatprep.subr.bf16.mxu0 0
        %468 = vmatpush2.bf16.msra.mxu0 0
        %469 = vmatprep.subr.bf16.mxu0 0
        %470 = vmatpush2.bf16.msra.mxu0 0
        %471 = vmatprep.subr.bf16.mxu0 0
        %472 = vmatpush2.bf16.msra.mxu0 0
        %473 = vmatprep.subr.bf16.mxu0 0
        %474 = vmatpush2.bf16.msra.mxu0 0
        %475 = vmatprep.subr.bf16.mxu0 0
        %476 = vmatpush2.bf16.msra.mxu0 0
        %477 = vmatprep.subr.bf16.mxu0 0
        %478 = vmatpush2.bf16.msra.mxu0 0
        %479 = vmatprep.subr.bf16.mxu0 0
        %480 = vmatpush2.bf16.msra.mxu0 0
        %481 = vmatprep.subr.bf16.mxu0 0
        %482 = vmatpush2.bf16.msra.mxu0 0
        %483 = vmatprep.mubr.bf16.mxu0 0
        %484 = vmatmul.mubr.bf16.gmra.mxu0 %v445
        %v485 = vpop.f32.mrf.mxu0
        %v486 = vadd.f32 0.0, %v485
        %v487 = vpop.f32.mrf.mxu0
        %v488 = vpop.f32.mrf.mxu0
        %v489 = vpop.f32.mrf.mxu0
        %490 = vdwg.mxu0
        %v492 = vsel %vm443, %v441, 0
        %v495 = vsel %vm447, %v437, 0
        %497 = vmatprep.subr.bf16.mxu0 0
        %498 = vmatpush1.bf16.msra.mxu0 0
        %499 = vmatprep.subr.bf16.mxu0 0
        %500 = vmatpush1.bf16.msra.mxu0 0
        %501 = vmatprep.subr.bf16.mxu0 0
        %502 = vmatpush1.bf16.msra.mxu0 0
        %503 = vmatprep.subr.bf16.mxu0 0
        %504 = vmatpush1.bf16.msra.mxu0 0
        %505 = vmatprep.subr.bf16.mxu0 0
        %506 = vmatpush1.bf16.msra.mxu0 0
        %507 = vmatprep.subr.bf16.mxu0 0
        %508 = vmatpush1.bf16.msra.mxu0 0
        %509 = vmatprep.subr.bf16.mxu0 0
        %510 = vmatpush1.bf16.msra.mxu0 0
        %511 = vmatprep.subr.bf16.mxu0 0
        %512 = vmatpush1.bf16.msra.mxu0 %v495
        %513 = vmatprep.subr.bf16.mxu0 0
        %514 = vmatpush2.bf16.msra.mxu0 0
        %515 = vmatprep.subr.bf16.mxu0 0
        %516 = vmatpush2.bf16.msra.mxu0 0
        %517 = vmatprep.subr.bf16.mxu0 0
        %518 = vmatpush2.bf16.msra.mxu0 0
        %519 = vmatprep.subr.bf16.mxu0 0
        %520 = vmatpush2.bf16.msra.mxu0 0
        %521 = vmatprep.subr.bf16.mxu0 0
        %522 = vmatpush2.bf16.msra.mxu0 0
        %523 = vmatprep.subr.bf16.mxu0 0
        %524 = vmatpush2.bf16.msra.mxu0 0
        %525 = vmatprep.subr.bf16.mxu0 0
        %526 = vmatpush2.bf16.msra.mxu0 0
        %527 = vmatprep.subr.bf16.mxu0 0
        %528 = vmatpush2.bf16.msra.mxu0 0
        %529 = vmatprep.mubr.bf16.mxu0 0
        %530 = vmatmul.mubr.bf16.gmra.mxu0 %v492
        %v531 = vpop.f32.mrf.mxu0
        %v532 = vadd.f32 %v486, %v531
        %v533 = vpop.f32.mrf.mxu0
        %v534 = vpop.f32.mrf.mxu0
        %v535 = vpop.f32.mrf.mxu0
        %536 = vdwg.mxu0
        %s537 = scalar_lea.vmem %s4, 4
        %v538 = vld [vmem:[%s537] sm:$0xf]
        %541 = vrot.lane.b32.xlu0 %v437, 127
        %v542 = vpop.permute.xlu0 %541
        %543 = vrot.lane.b32.xlu0 %v438, 127
        %v544 = vpop.permute.xlu0 %543
        %vm545 = vcmask 1039360
        %v546 = vsel %vm545, %v542, %v544
        %v548 = vsel %vm443, %v538, 0
        %v551 = vsel %vm447, %v546, 0
        %553 = vmatprep.subr.bf16.mxu0 0
        %554 = vmatpush1.bf16.msra.mxu0 0
        %555 = vmatprep.subr.bf16.mxu0 0
        %556 = vmatpush1.bf16.msra.mxu0 0
        %557 = vmatprep.subr.bf16.mxu0 0
        %558 = vmatpush1.bf16.msra.mxu0 0
        %559 = vmatprep.subr.bf16.mxu0 0
        %560 = vmatpush1.bf16.msra.mxu0 0
        %561 = vmatprep.subr.bf16.mxu0 0
        %562 = vmatpush1.bf16.msra.mxu0 0
        %563 = vmatprep.subr.bf16.mxu0 0
        %564 = vmatpush1.bf16.msra.mxu0 0
        %565 = vmatprep.subr.bf16.mxu0 0
        %566 = vmatpush1.bf16.msra.mxu0 0
        %567 = vmatprep.subr.bf16.mxu0 0
        %568 = vmatpush1.bf16.msra.mxu0 %v551
        %569 = vmatprep.subr.bf16.mxu0 0
        %570 = vmatpush2.bf16.msra.mxu0 0
        %571 = vmatprep.subr.bf16.mxu0 0
        %572 = vmatpush2.bf16.msra.mxu0 0
        %573 = vmatprep.subr.bf16.mxu0 0
        %574 = vmatpush2.bf16.msra.mxu0 0
        %575 = vmatprep.subr.bf16.mxu0 0
        %576 = vmatpush2.bf16.msra.mxu0 0
        %577 = vmatprep.subr.bf16.mxu0 0
        %578 = vmatpush2.bf16.msra.mxu0 0
        %579 = vmatprep.subr.bf16.mxu0 0
        %580 = vmatpush2.bf16.msra.mxu0 0
        %581 = vmatprep.subr.bf16.mxu0 0
        %582 = vmatpush2.bf16.msra.mxu0 0
        %583 = vmatprep.subr.bf16.mxu0 0
        %584 = vmatpush2.bf16.msra.mxu0 0
        %585 = vmatprep.mubr.bf16.mxu0 0
        %586 = vmatmul.mubr.bf16.gmra.mxu0 %v548
        %v587 = vpop.f32.mrf.mxu0
        %v588 = vadd.f32 0.0, %v587
        %v589 = vpop.f32.mrf.mxu0
        %v590 = vpop.f32.mrf.mxu0
        %v591 = vpop.f32.mrf.mxu0
        %592 = vdwg.mxu0
        %v593 = vadd.f32 %v532, %v588
        %s594 = scalar_lea.vmem %s5, 4
        %v595 = vld [vmem:[%s594] sm:$0xf]
        %598 = vrot.lane.b32.xlu0 %v439, 127
        %v599 = vpop.permute.xlu0 %598
        %600 = vrot.lane.b32.xlu0 %v440, 127
        %v601 = vpop.permute.xlu0 %600
        %v602 = vsel %vm545, %v599, %v601
        %v604 = vsel %vm443, %v595, 0
        %v607 = vsel %vm447, %v602, 0
        %609 = vmatprep.subr.bf16.mxu0 0
        %610 = vmatpush1.bf16.msra.mxu0 0
        %611 = vmatprep.subr.bf16.mxu0 0
        %612 = vmatpush1.bf16.msra.mxu0 0
        %613 = vmatprep.subr.bf16.mxu0 0
        %614 = vmatpush1.bf16.msra.mxu0 0
        %615 = vmatprep.subr.bf16.mxu0 0
        %616 = vmatpush1.bf16.msra.mxu0 0
        %617 = vmatprep.subr.bf16.mxu0 0
        %618 = vmatpush1.bf16.msra.mxu0 0
        %619 = vmatprep.subr.bf16.mxu0 0
        %620 = vmatpush1.bf16.msra.mxu0 0
        %621 = vmatprep.subr.bf16.mxu0 0
        %622 = vmatpush1.bf16.msra.mxu0 0
        %623 = vmatprep.subr.bf16.mxu0 0
        %624 = vmatpush1.bf16.msra.mxu0 %v607
        %625 = vmatprep.subr.bf16.mxu0 0
        %626 = vmatpush2.bf16.msra.mxu0 0
        %627 = vmatprep.subr.bf16.mxu0 0
        %628 = vmatpush2.bf16.msra.mxu0 0
        %629 = vmatprep.subr.bf16.mxu0 0
        %630 = vmatpush2.bf16.msra.mxu0 0
        %631 = vmatprep.subr.bf16.mxu0 0
        %632 = vmatpush2.bf16.msra.mxu0 0
        %633 = vmatprep.subr.bf16.mxu0 0
        %634 = vmatpush2.bf16.msra.mxu0 0
        %635 = vmatprep.subr.bf16.mxu0 0
        %636 = vmatpush2.bf16.msra.mxu0 0
        %637 = vmatprep.subr.bf16.mxu0 0
        %638 = vmatpush2.bf16.msra.mxu0 0
        %639 = vmatprep.subr.bf16.mxu0 0
        %640 = vmatpush2.bf16.msra.mxu0 0
        %641 = vmatprep.mubr.bf16.mxu0 0
        %642 = vmatmul.mubr.bf16.gmra.mxu0 %v604
        %v643 = vpop.f32.mrf.mxu0
        %v644 = vadd.f32 0.0, %v643
        %v645 = vpop.f32.mrf.mxu0
        %v646 = vpop.f32.mrf.mxu0
        %v647 = vpop.f32.mrf.mxu0
        %648 = vdwg.mxu0
        %v649 = vadd.f32 %v593, %v644
        %s650 = scalar_lea.vmem %s4, 8
        %v651 = vld [vmem:[%s650] sm:$0xf]
        %652 = vrot.lane.b32.xlu0 %v437, 126
        %v653 = vpop.permute.xlu0 %652
        %654 = vrot.lane.b32.xlu0 %v438, 126
        %v655 = vpop.permute.xlu0 %654
        %vm656 = vcmask 1031168
        %v657 = vsel %vm656, %v653, %v655
        %v659 = vsel %vm443, %v651, 0
        %v662 = vsel %vm447, %v657, 0
        %664 = vmatprep.subr.bf16.mxu0 0
        %665 = vmatpush1.bf16.msra.mxu0 0
        %666 = vmatprep.subr.bf16.mxu0 0
        %667 = vmatpush1.bf16.msra.mxu0 0
        %668 = vmatprep.subr.bf16.mxu0 0
        %669 = vmatpush1.bf16.msra.mxu0 0
        %670 = vmatprep.subr.bf16.mxu0 0
        %671 = vmatpush1.bf16.msra.mxu0 0
        %672 = vmatprep.subr.bf16.mxu0 0
        %673 = vmatpush1.bf16.msra.mxu0 0
        %674 = vmatprep.subr.bf16.mxu0 0
        %675 = vmatpush1.bf16.msra.mxu0 0
        %676 = vmatprep.subr.bf16.mxu0 0
        %677 = vmatpush1.bf16.msra.mxu0 0
        %678 = vmatprep.subr.bf16.mxu0 0
        %679 = vmatpush1.bf16.msra.mxu0 %v662
        %680 = vmatprep.subr.bf16.mxu0 0
        %681 = vmatpush2.bf16.msra.mxu0 0
        %682 = vmatprep.subr.bf16.mxu0 0
        %683 = vmatpush2.bf16.msra.mxu0 0
        %684 = vmatprep.subr.bf16.mxu0 0
        %685 = vmatpush2.bf16.msra.mxu0 0
        %686 = vmatprep.subr.bf16.mxu0 0
        %687 = vmatpush2.bf16.msra.mxu0 0
        %688 = vmatprep.subr.bf16.mxu0 0
        %689 = vmatpush2.bf16.msra.mxu0 0
        %690 = vmatprep.subr.bf16.mxu0 0
        %691 = vmatpush2.bf16.msra.mxu0 0
        %692 = vmatprep.subr.bf16.mxu0 0
        %693 = vmatpush2.bf16.msra.mxu0 0
        %694 = vmatprep.subr.bf16.mxu0 0
        %695 = vmatpush2.bf16.msra.mxu0 0
        %696 = vmatprep.mubr.bf16.mxu0 0
        %697 = vmatmul.mubr.bf16.gmra.mxu0 %v659
        %v698 = vpop.f32.mrf.mxu0
        %v699 = vadd.f32 0.0, %v698
        %v700 = vpop.f32.mrf.mxu0
        %v701 = vpop.f32.mrf.mxu0
        %v702 = vpop.f32.mrf.mxu0
        %703 = vdwg.mxu0
        %v704 = vadd.f32 %v649, %v699
        %s705 = scalar_lea.vmem %s5, 8
        %v706 = vld [vmem:[%s705] sm:$0xf]
        %707 = vrot.lane.b32.xlu0 %v439, 126
        %v708 = vpop.permute.xlu0 %707
        %709 = vrot.lane.b32.xlu0 %v440, 126
        %v710 = vpop.permute.xlu0 %709
        %v711 = vsel %vm656, %v708, %v710
        %v713 = vsel %vm443, %v706, 0
        %v716 = vsel %vm447, %v711, 0
        %718 = vmatprep.subr.bf16.mxu0 0
        %719 = vmatpush1.bf16.msra.mxu0 0
        %720 = vmatprep.subr.bf16.mxu0 0
        %721 = vmatpush1.bf16.msra.mxu0 0
        %722 = vmatprep.subr.bf16.mxu0 0
        %723 = vmatpush1.bf16.msra.mxu0 0
        %724 = vmatprep.subr.bf16.mxu0 0
        %725 = vmatpush1.bf16.msra.mxu0 0
        %726 = vmatprep.subr.bf16.mxu0 0
        %727 = vmatpush1.bf16.msra.mxu0 0
        %728 = vmatprep.subr.bf16.mxu0 0
        %729 = vmatpush1.bf16.msra.mxu0 0
        %730 = vmatprep.subr.bf16.mxu0 0
        %731 = vmatpush1.bf16.msra.mxu0 0
        %732 = vmatprep.subr.bf16.mxu0 0
        %733 = vmatpush1.bf16.msra.mxu0 %v716
        %734 = vmatprep.subr.bf16.mxu0 0
        %735 = vmatpush2.bf16.msra.mxu0 0
        %736 = vmatprep.subr.bf16.mxu0 0
        %737 = vmatpush2.bf16.msra.mxu0 0
        %738 = vmatprep.subr.bf16.mxu0 0
        %739 = vmatpush2.bf16.msra.mxu0 0
        %740 = vmatprep.subr.bf16.mxu0 0
        %741 = vmatpush2.bf16.msra.mxu0 0
        %742 = vmatprep.subr.bf16.mxu0 0
        %743 = vmatpush2.bf16.msra.mxu0 0
        %744 = vmatprep.subr.bf16.mxu0 0
        %745 = vmatpush2.bf16.msra.mxu0 0
        %746 = vmatprep.subr.bf16.mxu0 0
        %747 = vmatpush2.bf16.msra.mxu0 0
        %748 = vmatprep.subr.bf16.mxu0 0
        %749 = vmatpush2.bf16.msra.mxu0 0
        %750 = vmatprep.mubr.bf16.mxu0 0
        %751 = vmatmul.mubr.bf16.gmra.mxu0 %v713
        %v752 = vpop.f32.mrf.mxu0
        %v753 = vadd.f32 0.0, %v752
        %v754 = vpop.f32.mrf.mxu0
        %v755 = vpop.f32.mrf.mxu0
        %v756 = vpop.f32.mrf.mxu0
        %757 = vdwg.mxu0
        %v758 = vadd.f32 %v704, %v753
        %s759 = scalar_lea.vmem %s4, 12
        %v760 = vld [vmem:[%s759] sm:$0xf]
        %761 = vrot.lane.b32.xlu0 %v437, 125
        %v762 = vpop.permute.xlu0 %761
        %763 = vrot.lane.b32.xlu0 %v438, 125
        %v764 = vpop.permute.xlu0 %763
        %vm765 = vcmask 1022976
        %v766 = vsel %vm765, %v762, %v764
        %v768 = vsel %vm443, %v760, 0
        %v771 = vsel %vm447, %v766, 0
        %773 = vmatprep.subr.bf16.mxu0 0
        %774 = vmatpush1.bf16.msra.mxu0 0
        %775 = vmatprep.subr.bf16.mxu0 0
        %776 = vmatpush1.bf16.msra.mxu0 0
        %777 = vmatprep.subr.bf16.mxu0 0
        %778 = vmatpush1.bf16.msra.mxu0 0
        %779 = vmatprep.subr.bf16.mxu0 0
        %780 = vmatpush1.bf16.msra.mxu0 0
        %781 = vmatprep.subr.bf16.mxu0 0
        %782 = vmatpush1.bf16.msra.mxu0 0
        %783 = vmatprep.subr.bf16.mxu0 0
        %784 = vmatpush1.bf16.msra.mxu0 0
        %785 = vmatprep.subr.bf16.mxu0 0
        %786 = vmatpush1.bf16.msra.mxu0 0
        %787 = vmatprep.subr.bf16.mxu0 0
        %788 = vmatpush1.bf16.msra.mxu0 %v771
        %789 = vmatprep.subr.bf16.mxu0 0
        %790 = vmatpush2.bf16.msra.mxu0 0
        %791 = vmatprep.subr.bf16.mxu0 0
        %792 = vmatpush2.bf16.msra.mxu0 0
        %793 = vmatprep.subr.bf16.mxu0 0
        %794 = vmatpush2.bf16.msra.mxu0 0
        %795 = vmatprep.subr.bf16.mxu0 0
        %796 = vmatpush2.bf16.msra.mxu0 0
        %797 = vmatprep.subr.bf16.mxu0 0
        %798 = vmatpush2.bf16.msra.mxu0 0
        %799 = vmatprep.subr.bf16.mxu0 0
        %800 = vmatpush2.bf16.msra.mxu0 0
        %801 = vmatprep.subr.bf16.mxu0 0
        %802 = vmatpush2.bf16.msra.mxu0 0
        %803 = vmatprep.subr.bf16.mxu0 0
        %804 = vmatpush2.bf16.msra.mxu0 0
        %805 = vmatprep.mubr.bf16.mxu0 0
        %806 = vmatmul.mubr.bf16.gmra.mxu0 %v768
        %v807 = vpop.f32.mrf.mxu0
        %v808 = vadd.f32 0.0, %v807
        %v809 = vpop.f32.mrf.mxu0
        %v810 = vpop.f32.mrf.mxu0
        %v811 = vpop.f32.mrf.mxu0
        %812 = vdwg.mxu0
        %v813 = vadd.f32 %v758, %v808
        %s814 = scalar_lea.vmem %s5, 12
        %v815 = vld [vmem:[%s814] sm:$0xf]
        %816 = vrot.lane.b32.xlu0 %v439, 125
        %v817 = vpop.permute.xlu0 %816
        %818 = vrot.lane.b32.xlu0 %v440, 125
        %v819 = vpop.permute.xlu0 %818
        %v820 = vsel %vm765, %v817, %v819
        %v822 = vsel %vm443, %v815, 0
        %v825 = vsel %vm447, %v820, 0
        %827 = vmatprep.subr.bf16.mxu0 0
        %828 = vmatpush1.bf16.msra.mxu0 0
        %829 = vmatprep.subr.bf16.mxu0 0
        %830 = vmatpush1.bf16.msra.mxu0 0
        %831 = vmatprep.subr.bf16.mxu0 0
        %832 = vmatpush1.bf16.msra.mxu0 0
        %833 = vmatprep.subr.bf16.mxu0 0
        %834 = vmatpush1.bf16.msra.mxu0 0
        %835 = vmatprep.subr.bf16.mxu0 0
        %836 = vmatpush1.bf16.msra.mxu0 0
        %837 = vmatprep.subr.bf16.mxu0 0
        %838 = vmatpush1.bf16.msra.mxu0 0
        %839 = vmatprep.subr.bf16.mxu0 0
        %840 = vmatpush1.bf16.msra.mxu0 0
        %841 = vmatprep.subr.bf16.mxu0 0
        %842 = vmatpush1.bf16.msra.mxu0 %v825
        %843 = vmatprep.subr.bf16.mxu0 0
        %844 = vmatpush2.bf16.msra.mxu0 0
        %845 = vmatprep.subr.bf16.mxu0 0
        %846 = vmatpush2.bf16.msra.mxu0 0
        %847 = vmatprep.subr.bf16.mxu0 0
        %848 = vmatpush2.bf16.msra.mxu0 0
        %849 = vmatprep.subr.bf16.mxu0 0
        %850 = vmatpush2.bf16.msra.mxu0 0
        %851 = vmatprep.subr.bf16.mxu0 0
        %852 = vmatpush2.bf16.msra.mxu0 0
        %853 = vmatprep.subr.bf16.mxu0 0
        %854 = vmatpush2.bf16.msra.mxu0 0
        %855 = vmatprep.subr.bf16.mxu0 0
        %856 = vmatpush2.bf16.msra.mxu0 0
        %857 = vmatprep.subr.bf16.mxu0 0
        %858 = vmatpush2.bf16.msra.mxu0 0
        %859 = vmatprep.mubr.bf16.mxu0 0
        %860 = vmatmul.mubr.bf16.gmra.mxu0 %v822
        %v861 = vpop.f32.mrf.mxu0
        %v862 = vadd.f32 0.0, %v861
        %v863 = vpop.f32.mrf.mxu0
        %v864 = vpop.f32.mrf.mxu0
        %v865 = vpop.f32.mrf.mxu0
        %866 = vdwg.mxu0
        %v867 = vadd.f32 %v813, %v862
        %s868 = scalar_lea.vmem %s4, 16
        %v869 = vld [vmem:[%s868] sm:$0xf]
        %870 = vrot.lane.b32.xlu0 %v437, 124
        %v871 = vpop.permute.xlu0 %870
        %872 = vrot.lane.b32.xlu0 %v438, 124
        %v873 = vpop.permute.xlu0 %872
        %vm874 = vcmask 1014784
        %v875 = vsel %vm874, %v871, %v873
        %v877 = vsel %vm443, %v869, 0
        %v880 = vsel %vm447, %v875, 0
        %882 = vmatprep.subr.bf16.mxu0 0
        %883 = vmatpush1.bf16.msra.mxu0 0
        %884 = vmatprep.subr.bf16.mxu0 0
        %885 = vmatpush1.bf16.msra.mxu0 0
        %886 = vmatprep.subr.bf16.mxu0 0
        %887 = vmatpush1.bf16.msra.mxu0 0
        %888 = vmatprep.subr.bf16.mxu0 0
        %889 = vmatpush1.bf16.msra.mxu0 0
        %890 = vmatprep.subr.bf16.mxu0 0
        %891 = vmatpush1.bf16.msra.mxu0 0
        %892 = vmatprep.subr.bf16.mxu0 0
        %893 = vmatpush1.bf16.msra.mxu0 0
        %894 = vmatprep.subr.bf16.mxu0 0
        %895 = vmatpush1.bf16.msra.mxu0 0
        %896 = vmatprep.subr.bf16.mxu0 0
        %897 = vmatpush1.bf16.msra.mxu0 %v880
        %898 = vmatprep.subr.bf16.mxu0 0
        %899 = vmatpush2.bf16.msra.mxu0 0
        %900 = vmatprep.subr.bf16.mxu0 0
        %901 = vmatpush2.bf16.msra.mxu0 0
        %902 = vmatprep.subr.bf16.mxu0 0
        %903 = vmatpush2.bf16.msra.mxu0 0
        %904 = vmatprep.subr.bf16.mxu0 0
        %905 = vmatpush2.bf16.msra.mxu0 0
        %906 = vmatprep.subr.bf16.mxu0 0
        %907 = vmatpush2.bf16.msra.mxu0 0
        %908 = vmatprep.subr.bf16.mxu0 0
        %909 = vmatpush2.bf16.msra.mxu0 0
        %910 = vmatprep.subr.bf16.mxu0 0
        %911 = vmatpush2.bf16.msra.mxu0 0
        %912 = vmatprep.subr.bf16.mxu0 0
        %913 = vmatpush2.bf16.msra.mxu0 0
        %914 = vmatprep.mubr.bf16.mxu0 0
        %915 = vmatmul.mubr.bf16.gmra.mxu0 %v877
        %v916 = vpop.f32.mrf.mxu0
        %v917 = vadd.f32 0.0, %v916
        %v918 = vpop.f32.mrf.mxu0
        %v919 = vpop.f32.mrf.mxu0
        %v920 = vpop.f32.mrf.mxu0
        %921 = vdwg.mxu0
        %v922 = vadd.f32 %v867, %v917
        %s923 = scalar_lea.vmem %s5, 16
        %v924 = vld [vmem:[%s923] sm:$0xf]
        %925 = vrot.lane.b32.xlu0 %v439, 124
        %v926 = vpop.permute.xlu0 %925
        %927 = vrot.lane.b32.xlu0 %v440, 124
        %v928 = vpop.permute.xlu0 %927
        %v929 = vsel %vm874, %v926, %v928
        %v931 = vsel %vm443, %v924, 0
        %v934 = vsel %vm447, %v929, 0
        %936 = vmatprep.subr.bf16.mxu0 0
        %937 = vmatpush1.bf16.msra.mxu0 0
        %938 = vmatprep.subr.bf16.mxu0 0
        %939 = vmatpush1.bf16.msra.mxu0 0
        %940 = vmatprep.subr.bf16.mxu0 0
        %941 = vmatpush1.bf16.msra.mxu0 0
        %942 = vmatprep.subr.bf16.mxu0 0
        %943 = vmatpush1.bf16.msra.mxu0 0
        %944 = vmatprep.subr.bf16.mxu0 0
        %945 = vmatpush1.bf16.msra.mxu0 0
        %946 = vmatprep.subr.bf16.mxu0 0
        %947 = vmatpush1.bf16.msra.mxu0 0
        %948 = vmatprep.subr.bf16.mxu0 0
        %949 = vmatpush1.bf16.msra.mxu0 0
        %950 = vmatprep.subr.bf16.mxu0 0
        %951 = vmatpush1.bf16.msra.mxu0 %v934
        %952 = vmatprep.subr.bf16.mxu0 0
        %953 = vmatpush2.bf16.msra.mxu0 0
        %954 = vmatprep.subr.bf16.mxu0 0
        %955 = vmatpush2.bf16.msra.mxu0 0
        %956 = vmatprep.subr.bf16.mxu0 0
        %957 = vmatpush2.bf16.msra.mxu0 0
        %958 = vmatprep.subr.bf16.mxu0 0
        %959 = vmatpush2.bf16.msra.mxu0 0
        %960 = vmatprep.subr.bf16.mxu0 0
        %961 = vmatpush2.bf16.msra.mxu0 0
        %962 = vmatprep.subr.bf16.mxu0 0
        %963 = vmatpush2.bf16.msra.mxu0 0
        %964 = vmatprep.subr.bf16.mxu0 0
        %965 = vmatpush2.bf16.msra.mxu0 0
        %966 = vmatprep.subr.bf16.mxu0 0
        %967 = vmatpush2.bf16.msra.mxu0 0
        %968 = vmatprep.mubr.bf16.mxu0 0
        %969 = vmatmul.mubr.bf16.gmra.mxu0 %v931
        %v970 = vpop.f32.mrf.mxu0
        %v971 = vadd.f32 0.0, %v970
        %v972 = vpop.f32.mrf.mxu0
        %v973 = vpop.f32.mrf.mxu0
        %v974 = vpop.f32.mrf.mxu0
        %975 = vdwg.mxu0
        %v976 = vadd.f32 %v922, %v971
        %v977 = vld [vmem:[%s6] sm:$0xff]
        %979 = vset.pattern.permute.xlu0 0
        %980 = vperm.xlu0 %979, %v977
        %v981 = vpop.permute.xlu0 %980
        %v983 = vmul.f32 %v976, %v981
        %v984 = vld [vmem:[%s7] sm:$0xff]
        %986 = vset.pattern.permute.xlu0 0
        %987 = vperm.xlu0 %986, %v984
        %v988 = vpop.permute.xlu0 %987
        %v990 = vadd.f32 %v983, %v988
        %vm991 = vcmp.ge.f32.partialorder %v990, 0.0
        %v992 = vmul.f32 %v990, 0.01
        %v993 = vsel %vm991, %v990, %v992
        %994 = vst [vmem:[%s399] sm:$0xff] %v993
        %s995 = sand.u32 %s244, 1
        %s996 = scalar_lea.sflag [#allocation3], %s995
        %s997 = sand.u32 %s244, 1
        %s998 = smul.addr %s997, 8
        %s999 = scalar_lea.vmem [#allocation2], %s998
        // Predicated region
        $region53: #{upsample_block.3} parent=51 // pred_check
          %p1000 = pneg %p254
        $region54: #{upsample_block.3} parent=51 // pred_check_branch
          %1002 = sbr.rel (%p1000) target = $region56
        $region55: #{upsample_block.3} parent=51 // pred_region
          %s1004 = ssub.s32 128, 128
          %1005 = vsyncadd %s996, %s1004
          %s1006 = smul.addr %s26, 2
          %s1007 = sadd.s32 %s27, %s1006
          %s1008 = smul.addr %s1007, 128
          %s1009 = scalar_lea.hbm %s8, %s1008
          %s1011 = sshll.u32 %s999, 4
          %s1012 = int_to_ptr.vmem [resolvable:$true] %s1011
          %1014 = dma.vmem_to_hbm [thread:$0]  %s1012, 128, %s1009, %s996
        $region56: #{upsample_block.3} parent=51 // pred_fallthru
          _
      $region52: #{upsample_block.3} parent=5 // pred_fallthru
        _
      %p1015 = scmp.le.s32.totalorder 2, %s17
      // Predicated region
      $region57: #{upsample_block.3} parent=5 // pred_check
        %p1016 = pneg %p1015
      $region58: #{upsample_block.3} parent=5 // pred_check_branch
        %1018 = sbr.rel (%p1016) target = $region60
      $region59: #{upsample_block.3} parent=5 // pred_region
        %s1019 = ssub.s32 %s17, 2
        // Predicated region
        $region61: #{upsample_block.3} parent=59 // pred_check
          %p1020 = pneg %p260
        $region62: #{upsample_block.3} parent=59 // pred_check_branch
          %1022 = sbr.rel (%p1020) target = $region64
        $region63: #{upsample_block.3} parent=59 // pred_region
          %s1023 = sand.u32 %s245, 1
          %s1024 = scalar_lea.sflag [#allocation3], %s1023
          %s1025 = sand.u32 %s245, 1
          %s1026 = smul.addr %s1025, 8
          %s1027 = scalar_lea.vmem [#allocation2], %s1026
          %1028 = dma.done %s1024, 128
        $region64: #{upsample_block.3} parent=59 // pred_fallthru
          _
      $region60: #{upsample_block.3} parent=5 // pred_fallthru
        _
    $region6: #{upsample_block.3} parent=1 // loop_footer
      %s21 = sadd.s32 1, %s17
    $region7: #{upsample_block.3} parent=1 // loop_footer_branch
      %16 = sbr.rel target = $region3
    $region8: #{upsample_block.3} parent=1 // loop_exit
      _
    %1029 = vsyncpa [#allocation3], 1
    %s1030 = scalar_lea.sflag [#allocation3], 1
    %1031 = vsyncpa %s1030, 1

// kernel: upsample_block.2
$region0: #{upsample_block.2}
  #allocation0 [shape = 'u32[]', space=smem, size = 0x4, offset = 0x4, fixed_abs, tag = 'smem constant byte address 0x4 - core index']
  #allocation1 [shape = 'u32[144,128]{1,0:T(1,128)}', space=vmem, size = 0x12000, scoped, tag = 'internal scratch']
  %s0 = inlined_call_operand.vmem [shape: bf16[2,6,384], index: 0, kind: input, shape index: {}, may-alias: {0,1}]
  %s1 = inlined_call_operand.vmem [shape: bf16[2,6,384], index: 1, kind: input, shape index: {}, may-alias: {0,1}]
  %s2 = inlined_call_operand.vmem [shape: bf16[2,6,384], index: 2, kind: input, shape index: {}, may-alias: {2,3}]
  %s3 = inlined_call_operand.vmem [shape: bf16[2,6,384], index: 3, kind: input, shape index: {}, may-alias: {2,3}]
  %s4 = inlined_call_operand.vmem [shape: bf16[5,8,6], index: 4, kind: input, shape index: {}]
  %s5 = inlined_call_operand.vmem [shape: bf16[5,8,6], index: 5, kind: input, shape index: {}]
  %s6 = inlined_call_operand.vmem [shape: f32[2,2,8,2], index: 6, kind: output, shape index: {}]
  %s7 = sld [smem:[#allocation0]]
  $region57: #{upsample_block.2} parent=0
    _
  %s9 = ssub.s32 1, %s7
  %s10 = scalar_select 0, %s9, %s7
  loop: start=0, step=1, limit=6
  $region2: #{upsample_block.2} parent=0 // loop_pre_header
    _
  $region3: #{upsample_block.2} parent=0 // loop_header
    %s12 = sphi 0, %s16
    %p13 = scmp.ge.s32.totalorder %s12, 6
    %s19 = sphi 0, %s31
    %s20 = sphi 0, %s27
    %s21 = sphi 0, %s19
    %s22 = sphi 0, %s20
    %s23 = sphi 0, %s21
    %s24 = sphi 0, %s22
    %s36 = sphi 0, %s38
    %s39 = sphi 0, %s36
    %s40 = sphi 0, %s39
    %s56 = sphi 0, %s40
    %s66 = sphi 0, %s68
    %s69 = sphi 0, %s66
    %s70 = sphi 0, %s69
    %s86 = sphi 0, %s70
    %s94 = sphi 0, %s96
    %s97 = sphi 0, %s94
    %s98 = sphi 0, %s97
    %s114 = sphi 0, %s98
    %s124 = sphi 0, %s126
    %s127 = sphi 0, %s124
    %s128 = sphi 0, %s127
    %s144 = sphi 0, %s128
    %s148 = sphi 0, %s148
    %s150 = sphi 0, %s148
    %s151 = sphi 0, %s150
    %s165 = sphi 0, %s151
    %s169 = sphi 0, %s169
    %s171 = sphi 0, %s169
    %s172 = sphi 0, %s171
    %s186 = sphi 0, %s172
    %s194 = sphi 0, %s196
    %s197 = sphi 0, %s194
    %s198 = sphi 0, %s197
    %s214 = sphi 0, %s198
  $region4: #{upsample_block.2} parent=0 // loop_header_branch
    %15 = sbr.rel (%p13) target = $region8
  $region5: #{upsample_block.2} parent=0 // loop_body
    %s17 = ssub.s32 %s12, 1
    %s18 = ssub.s32 %s12, 2
    %s25 = sadd.s32 1, %s20
    %p26 = scmp.ge.s32.totalorder %s25, 2
    %s27 = scalar_select %p26, 0, %s25
    %s28 = sadd.s32 1, %s19
    %s29 = scalar_select %p26, %s28, %s19
    %p30 = scmp.ge.s32.totalorder %s29, 2
    %s31 = scalar_select %p30, 0, %s29
    %s32 = ssub.s32 %s19, %s31
    %s33 = ssub.s32 %s20, %s27
    %s34 = sor.u32 %s32, %s33
    %p35 = scmp.eq.s32.totalorder %s34, 0
    %s37 = sadd.s32 %s36, 1
    %s38 = scalar_select %p35, %s36, %s37
    %p41 = pneg %p35
    %p42 = scmp.eq.s32.totalorder %s12, 3
    %p43 = por %p41, %p42
    %p44 = scmp.ne.s32.totalorder %s36, %s39
    %p45 = scmp.eq.s32.totalorder %s12, 0
    %p46 = por %p44, %p45
    %p47 = scmp.ne.s32.totalorder %s36, %s39
    %p48 = scmp.eq.s32.totalorder %s17, 3
    %p49 = por %p47, %p48
    %p50 = scmp.ne.s32.totalorder %s39, %s40
    %p51 = scmp.eq.s32.totalorder %s17, 0
    %p52 = por %p50, %p51
    %p53 = scmp.ne.s32.totalorder %s39, %s40
    %p54 = scmp.eq.s32.totalorder %s18, 3
    %p55 = por %p53, %p54
    %p57 = scmp.ne.s32.totalorder %s40, %s56
    %p58 = scmp.eq.s32.totalorder %s18, 0
    %p59 = por %p57, %p58
    %s60 = sadd.s32 %s20, 1
    %s61 = sadd.s32 %s27, 1
    %s62 = ssub.s32 %s19, %s31
    %s63 = ssub.s32 %s60, %s61
    %s64 = sor.u32 %s62, %s63
    %p65 = scmp.eq.s32.totalorder %s64, 0
    %s67 = sadd.s32 %s66, 1
    %s68 = scalar_select %p65, %s66, %s67
    %p71 = pneg %p65
    %p72 = scmp.eq.s32.totalorder %s12, 3
    %p73 = por %p71, %p72
    %p74 = scmp.ne.s32.totalorder %s66, %s69
    %p75 = scmp.eq.s32.totalorder %s12, 0
    %p76 = por %p74, %p75
    %p77 = scmp.ne.s32.totalorder %s66, %s69
    %p78 = scmp.eq.s32.totalorder %s17, 3
    %p79 = por %p77, %p78
    %p80 = scmp.ne.s32.totalorder %s69, %s70
    %p81 = scmp.eq.s32.totalorder %s17, 0
    %p82 = por %p80, %p81
    %p83 = scmp.ne.s32.totalorder %s69, %s70
    %p84 = scmp.eq.s32.totalorder %s18, 3
    %p85 = por %p83, %p84
    %p87 = scmp.ne.s32.totalorder %s70, %s86
    %p88 = scmp.eq.s32.totalorder %s18, 0
    %p89 = por %p87, %p88
    %s90 = ssub.s32 %s19, %s31
    %s91 = ssub.s32 %s20, %s27
    %s92 = sor.u32 %s90, %s91
    %p93 = scmp.eq.s32.totalorder %s92, 0
    %s95 = sadd.s32 %s94, 1
    %s96 = scalar_select %p93, %s94, %s95
    %p99 = pneg %p93
    %p100 = scmp.eq.s32.totalorder %s12, 3
    %p101 = por %p99, %p100
    %p102 = scmp.ne.s32.totalorder %s94, %s97
    %p103 = scmp.eq.s32.totalorder %s12, 0
    %p104 = por %p102, %p103
    %p105 = scmp.ne.s32.totalorder %s94, %s97
    %p106 = scmp.eq.s32.totalorder %s17, 3
    %p107 = por %p105, %p106
    %p108 = scmp.ne.s32.totalorder %s97, %s98
    %p109 = scmp.eq.s32.totalorder %s17, 0
    %p110 = por %p108, %p109
    %p111 = scmp.ne.s32.totalorder %s97, %s98
    %p112 = scmp.eq.s32.totalorder %s18, 3
    %p113 = por %p111, %p112
    %p115 = scmp.ne.s32.totalorder %s98, %s114
    %p116 = scmp.eq.s32.totalorder %s18, 0
    %p117 = por %p115, %p116
    %s118 = sadd.s32 %s20, 1
    %s119 = sadd.s32 %s27, 1
    %s120 = ssub.s32 %s19, %s31
    %s121 = ssub.s32 %s118, %s119
    %s122 = sor.u32 %s120, %s121
    %p123 = scmp.eq.s32.totalorder %s122, 0
    %s125 = sadd.s32 %s124, 1
    %s126 = scalar_select %p123, %s124, %s125
    %p129 = pneg %p123
    %p130 = scmp.eq.s32.totalorder %s12, 3
    %p131 = por %p129, %p130
    %p132 = scmp.ne.s32.totalorder %s124, %s127
    %p133 = scmp.eq.s32.totalorder %s12, 0
    %p134 = por %p132, %p133
    %p135 = scmp.ne.s32.totalorder %s124, %s127
    %p136 = scmp.eq.s32.totalorder %s17, 3
    %p137 = por %p135, %p136
    %p138 = scmp.ne.s32.totalorder %s127, %s128
    %p139 = scmp.eq.s32.totalorder %s17, 0
    %p140 = por %p138, %p139
    %p141 = scmp.ne.s32.totalorder %s127, %s128
    %p142 = scmp.eq.s32.totalorder %s18, 3
    %p143 = por %p141, %p142
    %p145 = scmp.ne.s32.totalorder %s128, %s144
    %p146 = scmp.eq.s32.totalorder %s18, 0
    %p147 = por %p145, %p146
    %s149 = sadd.s32 %s148, 1
    %p152 = scmp.eq.s32.totalorder %s12, 3
    %p153 = scmp.ne.s32.totalorder %s148, %s150
    %p154 = scmp.eq.s32.totalorder %s12, 0
    %p155 = por %p153, %p154
    %p156 = scmp.ne.s32.totalorder %s148, %s150
    %p157 = scmp.eq.s32.totalorder %s17, 3
    %p158 = por %p156, %p157
    %p159 = scmp.ne.s32.totalorder %s150, %s151
    %p160 = scmp.eq.s32.totalorder %s17, 0
    %p161 = por %p159, %p160
    %p162 = scmp.ne.s32.totalorder %s150, %s151
    %p163 = scmp.eq.s32.totalorder %s18, 3
    %p164 = por %p162, %p163
    %p166 = scmp.ne.s32.totalorder %s151, %s165
    %p167 = scmp.eq.s32.totalorder %s18, 0
    %p168 = por %p166, %p167
    %s170 = sadd.s32 %s169, 1
    %p173 = scmp.eq.s32.totalorder %s12, 3
    %p174 = scmp.ne.s32.totalorder %s169, %s171
    %p175 = scmp.eq.s32.totalorder %s12, 0
    %p176 = por %p174, %p175
    %p177 = scmp.ne.s32.totalorder %s169, %s171
    %p178 = scmp.eq.s32.totalorder %s17, 3
    %p179 = por %p177, %p178
    %p180 = scmp.ne.s32.totalorder %s171, %s172
    %p181 = scmp.eq.s32.totalorder %s17, 0
    %p182 = por %p180, %p181
    %p183 = scmp.ne.s32.totalorder %s171, %s172
    %p184 = scmp.eq.s32.totalorder %s18, 3
    %p185 = por %p183, %p184
    %p187 = scmp.ne.s32.totalorder %s172, %s186
    %p188 = scmp.eq.s32.totalorder %s18, 0
    %p189 = por %p187, %p188
    %s190 = ssub.s32 %s19, %s31
    %s191 = ssub.s32 %s20, %s27
    %s192 = sor.u32 %s190, %s191
    %p193 = scmp.eq.s32.totalorder %s192, 0
    %s195 = sadd.s32 %s194, 1
    %s196 = scalar_select %p193, %s194, %s195
    %p199 = pneg %p193
    %p200 = scmp.eq.s32.totalorder %s12, 3
    %p201 = por %p199, %p200
    %p202 = scmp.ne.s32.totalorder %s194, %s197
    %p203 = scmp.eq.s32.totalorder %s12, 0
    %p204 = por %p202, %p203
    %p205 = scmp.ne.s32.totalorder %s194, %s197
    %p206 = scmp.eq.s32.totalorder %s17, 3
    %p207 = por %p205, %p206
    %p208 = scmp.ne.s32.totalorder %s197, %s198
    %p209 = scmp.eq.s32.totalorder %s17, 0
    %p210 = por %p208, %p209
    %p211 = scmp.ne.s32.totalorder %s197, %s198
    %p212 = scmp.eq.s32.totalorder %s18, 3
    %p213 = por %p211, %p212
    %p215 = scmp.ne.s32.totalorder %s198, %s214
    %p216 = scmp.eq.s32.totalorder %s18, 0
    %p217 = por %p215, %p216
    %p218 = scmp.le.s32.totalorder 1, %s12
    %p219 = scmp.lt.s32.totalorder %s12, 5
    %p220 = pnand %p218, %p219
    %p221 = pneg %p220
    // Predicated region
    $region9: #{upsample_block.2} parent=5 // pred_check
      _
    $region10: #{upsample_block.2} parent=5 // pred_check_branch
      %223 = sbr.rel (%p220) target = $region12
    $region11: #{upsample_block.2} parent=5 // pred_region
      %s224 = ssub.s32 %s12, 1
      // Predicated region
      $region13: #{upsample_block.2} parent=11 // pred_check
        %p225 = pneg %p161
      $region14: #{upsample_block.2} parent=11 // pred_check_branch
        %227 = sbr.rel (%p225) target = $region16
      $region15: #{upsample_block.2} parent=11 // pred_region
        _
      $region16: #{upsample_block.2} parent=11 // pred_fallthru
        _
      // Predicated region
      $region17: #{upsample_block.2} parent=11 // pred_check
        %p228 = pneg %p182
      $region18: #{upsample_block.2} parent=11 // pred_check_branch
        %230 = sbr.rel (%p228) target = $region20
      $region19: #{upsample_block.2} parent=11 // pred_region
        _
      $region20: #{upsample_block.2} parent=11 // pred_fallthru
        _
    $region12: #{upsample_block.2} parent=5 // pred_fallthru
      _
    %p231 = scmp.lt.s32.totalorder %s12, 4
    // Predicated region
    $region21: #{upsample_block.2} parent=5 // pred_check
      %p232 = pneg %p231
    $region22: #{upsample_block.2} parent=5 // pred_check_branch
      %234 = sbr.rel (%p232) target = $region24
    $region23: #{upsample_block.2} parent=5 // pred_region
      // Predicated region
      $region25: #{upsample_block.2} parent=23 // pred_check
        %p235 = pneg %p46
      $region26: #{upsample_block.2} parent=23 // pred_check_branch
        %237 = sbr.rel (%p235) target = $region28
      $region27: #{upsample_block.2} parent=23 // pred_region
        %p238 = scmp.lt.s32.totalorder %s19, 1
        %s239 = scalar_select %p238, %s19, 1
        %p240 = scmp.lt.s32.totalorder %s20, 2
        %s241 = scalar_select %p240, %s20, 2
        %s242 = smul.addr %s239, 3
        %s243 = sadd.s32 %s241, %s242
        %s244 = smul.addr %s243, 4
        %s245 = scalar_lea.vmem %s0, %s244
      $region28: #{upsample_block.2} parent=23 // pred_fallthru
        _
      // Predicated region
      $region29: #{upsample_block.2} parent=23 // pred_check
        %p246 = pneg %p76
      $region30: #{upsample_block.2} parent=23 // pred_check_branch
        %248 = sbr.rel (%p246) target = $region32
      $region31: #{upsample_block.2} parent=23 // pred_region
        %s249 = sadd.s32 %s20, 1
        %p250 = scmp.lt.s32.totalorder %s19, 1
        %s251 = scalar_select %p250, %s19, 1
        %p252 = scmp.lt.s32.totalorder %s249, 2
        %s253 = scalar_select %p252, %s249, 2
        %s254 = smul.addr %s251, 3
        %s255 = sadd.s32 %s253, %s254
        %s256 = smul.addr %s255, 4
        %s257 = scalar_lea.vmem %s1, %s256
        %s258 = sadd.s32 %s20, 1
      $region32: #{upsample_block.2} parent=23 // pred_fallthru
        _
      // Predicated region
      $region33: #{upsample_block.2} parent=23 // pred_check
        %p259 = pneg %p104
      $region34: #{upsample_block.2} parent=23 // pred_check_branch
        %261 = sbr.rel (%p259) target = $region36
      $region35: #{upsample_block.2} parent=23 // pred_region
        %p262 = scmp.lt.s32.totalorder %s19, 1
        %s263 = scalar_select %p262, %s19, 1
        %p264 = scmp.lt.s32.totalorder %s20, 2
        %s265 = scalar_select %p264, %s20, 2
        %s266 = smul.addr %s263, 3
        %s267 = sadd.s32 %s265, %s266
        %s268 = smul.addr %s267, 4
        %s269 = scalar_lea.vmem %s2, %s268
      $region36: #{upsample_block.2} parent=23 // pred_fallthru
        _
      // Predicated region
      $region37: #{upsample_block.2} parent=23 // pred_check
        %p270 = pneg %p134
      $region38: #{upsample_block.2} parent=23 // pred_check_branch
        %272 = sbr.rel (%p270) target = $region40
      $region39: #{upsample_block.2} parent=23 // pred_region
        %s273 = sadd.s32 %s20, 1
        %p274 = scmp.lt.s32.totalorder %s19, 1
        %s275 = scalar_select %p274, %s19, 1
        %p276 = scmp.lt.s32.totalorder %s273, 2
        %s277 = scalar_select %p276, %s273, 2
        %s278 = smul.addr %s275, 3
        %s279 = sadd.s32 %s277, %s278
        %s280 = smul.addr %s279, 4
        %s281 = scalar_lea.vmem %s3, %s280
        %s282 = sadd.s32 %s20, 1
      $region40: #{upsample_block.2} parent=23 // pred_fallthru
        _
    $region24: #{upsample_block.2} parent=5 // pred_fallthru
      _
    %p283 = scmp.le.s32.totalorder 1, %s12
    %p284 = scmp.lt.s32.totalorder %s12, 5
    %p285 = pnand %p283, %p284
    %p286 = pneg %p285
    // Predicated region
    $region41: #{upsample_block.2} parent=5 // pred_check
      _
    $region42: #{upsample_block.2} parent=5 // pred_check_branch
      %288 = sbr.rel (%p285) target = $region44
    $region43: #{upsample_block.2} parent=5 // pred_region
      %s289 = ssub.s32 %s12, 1
      %p290 = scmp.lt.s32.totalorder %s21, 1
      %s291 = scalar_select %p290, %s21, 1
      %p292 = scmp.lt.s32.totalorder %s22, 2
      %s293 = scalar_select %p292, %s22, 2
      %s294 = smul.addr %s291, 3
      %s295 = sadd.s32 %s293, %s294
      %s296 = smul.addr %s295, 4
      %s297 = scalar_lea.vmem %s0, %s296
      %p298 = pneg %p52
      %p299 = pneg %p49
      %s300 = sadd.s32 %s22, 1
      %p301 = scmp.lt.s32.totalorder %s21, 1
      %s302 = scalar_select %p301, %s21, 1
      %p303 = scmp.lt.s32.totalorder %s300, 2
      %s304 = scalar_select %p303, %s300, 2
      %s305 = smul.addr %s302, 3
      %s306 = sadd.s32 %s304, %s305
      %s307 = smul.addr %s306, 4
      %s308 = scalar_lea.vmem %s1, %s307
      %p309 = pneg %p82
      %p310 = pneg %p79
      %p311 = scmp.lt.s32.totalorder %s21, 1
      %s312 = scalar_select %p311, %s21, 1
      %p313 = scmp.lt.s32.totalorder %s22, 2
      %s314 = scalar_select %p313, %s22, 2
      %s315 = smul.addr %s312, 3
      %s316 = sadd.s32 %s314, %s315
      %s317 = smul.addr %s316, 4
      %s318 = scalar_lea.vmem %s2, %s317
      %p319 = pneg %p110
      %p320 = pneg %p107
      %s321 = sadd.s32 %s22, 1
      %p322 = scmp.lt.s32.totalorder %s21, 1
      %s323 = scalar_select %p322, %s21, 1
      %p324 = scmp.lt.s32.totalorder %s321, 2
      %s325 = scalar_select %p324, %s321, 2
      %s326 = smul.addr %s323, 3
      %s327 = sadd.s32 %s325, %s326
      %s328 = smul.addr %s327, 4
      %s329 = scalar_lea.vmem %s3, %s328
      %p330 = pneg %p140
      %p331 = pneg %p137
      %p332 = pneg %p161
      %p333 = pneg %p158
      %p334 = pneg %p182
      %p335 = pneg %p179
      %p336 = pneg %p210
      %p337 = pneg %p207
      %p338 = scmp.lt.s32.totalorder %s21, 1
      %s339 = scalar_select %p338, %s21, 1
      %p340 = scmp.lt.s32.totalorder %s22, 1
      %s341 = scalar_select %p340, %s22, 1
      %s342 = smul.addr %s339, 2
      %s343 = sadd.s32 %s341, %s342
      %s344 = smul.addr %s343, 8
      %s345 = scalar_lea.vmem %s6, %s344
      %p346 = scmp.lt.s32.totalorder %s21, 1
      %s347 = scalar_select %p346, %s21, 1
      %p348 = scmp.lt.s32.totalorder %s22, 2
      %s349 = scalar_select %p348, %s22, 2
      %s350 = smul.addr %s347, 3
      %s351 = sadd.s32 %s349, %s350
      %s352 = smul.addr %s351, 4
      %s353 = scalar_lea.vmem %s0, %s352
      %s354 = sadd.s32 %s22, 1
      %p355 = scmp.lt.s32.totalorder %s21, 1
      %s356 = scalar_select %p355, %s21, 1
      %p357 = scmp.lt.s32.totalorder %s354, 2
      %s358 = scalar_select %p357, %s354, 2
      %s359 = smul.addr %s356, 3
      %s360 = sadd.s32 %s358, %s359
      %s361 = smul.addr %s360, 4
      %s362 = scalar_lea.vmem %s1, %s361
      %s363 = sadd.s32 %s22, 1
      %p364 = scmp.lt.s32.totalorder %s21, 1
      %s365 = scalar_select %p364, %s21, 1
      %p366 = scmp.lt.s32.totalorder %s22, 2
      %s367 = scalar_select %p366, %s22, 2
      %s368 = smul.addr %s365, 3
      %s369 = sadd.s32 %s367, %s368
      %s370 = smul.addr %s369, 4
      %s371 = scalar_lea.vmem %s2, %s370
      %s372 = sadd.s32 %s22, 1
      %p373 = scmp.lt.s32.totalorder %s21, 1
      %s374 = scalar_select %p373, %s21, 1
      %p375 = scmp.lt.s32.totalorder %s372, 2
      %s376 = scalar_select %p375, %s372, 2
      %s377 = smul.addr %s374, 3
      %s378 = sadd.s32 %s376, %s377
      %s379 = smul.addr %s378, 4
      %s380 = scalar_lea.vmem %s3, %s379
      %s381 = sadd.s32 %s22, 1
      %p382 = scmp.lt.s32.totalorder %s21, 1
      %s383 = scalar_select %p382, %s21, 1
      %p384 = scmp.lt.s32.totalorder %s22, 1
      %s385 = scalar_select %p384, %s22, 1
      %s386 = smul.addr %s383, 2
      %s387 = sadd.s32 %s385, %s386
      %s388 = smul.addr %s387, 8
      %s389 = scalar_lea.vmem %s6, %s388
      %v391 = vld [vmem:[%s353] sm:$0x7]
      %v392 = vld [vmem:[%s362] sm:$0x7]
      %v393 = vld [vmem:[%s371] sm:$0x7]
      %v394 = vld [vmem:[%s380] sm:$0x7]
      %v395 = vld [vmem:[%s4] sm:$0xf]
      %v396 = vld [vmem:[%s5] sm:$0xf]
      %vm397 = vcmask 48128
      %v399 = vsel %vm397, %v396, 0
      %vm401 = vcmask 1042432
      %v403 = vsel %vm401, %v393, 0
      %405 = vmatprep.subr.bf16.mxu0 0
      %406 = vmatpush1.bf16.msra.mxu0 0
      %407 = vmatprep.subr.bf16.mxu0 0
      %408 = vmatpush1.bf16.msra.mxu0 0
      %409 = vmatprep.subr.bf16.mxu0 0
      %410 = vmatpush1.bf16.msra.mxu0 0
      %411 = vmatprep.subr.bf16.mxu0 0
      %412 = vmatpush1.bf16.msra.mxu0 0
      %413 = vmatprep.subr.bf16.mxu0 0
      %414 = vmatpush1.bf16.msra.mxu0 0
      %415 = vmatprep.subr.bf16.mxu0 0
      %416 = vmatpush1.bf16.msra.mxu0 0
      %417 = vmatprep.subr.bf16.mxu0 0
      %418 = vmatpush1.bf16.msra.mxu0 0
      %419 = vmatprep.subr.bf16.mxu0 0
      %420 = vmatpush1.bf16.msra.mxu0 %v403
      %421 = vmatprep.subr.bf16.mxu0 0
      %422 = vmatpush2.bf16.msra.mxu0 0
      %423 = vmatprep.subr.bf16.mxu0 0
      %424 = vmatpush2.bf16.msra.mxu0 0
      %425 = vmatprep.subr.bf16.mxu0 0
      %426 = vmatpush2.bf16.msra.mxu0 0
      %427 = vmatprep.subr.bf16.mxu0 0
      %428 = vmatpush2.bf16.msra.mxu0 0
      %429 = vmatprep.subr.bf16.mxu0 0
      %430 = vmatpush2.bf16.msra.mxu0 0
      %431 = vmatprep.subr.bf16.mxu0 0
      %432 = vmatpush2.bf16.msra.mxu0 0
      %433 = vmatprep.subr.bf16.mxu0 0
      %434 = vmatpush2.bf16.msra.mxu0 0
      %435 = vmatprep.subr.bf16.mxu0 0
      %436 = vmatpush2.bf16.msra.mxu0 0
      %437 = vmatprep.mubr.bf16.mxu0 0
      %438 = vmatmul.mubr.bf16.gmra.mxu0 %v399
      %v439 = vpop.f32.mrf.mxu0
      %v440 = vadd.f32 0.0, %v439
      %v441 = vpop.f32.mrf.mxu0
      %v442 = vpop.f32.mrf.mxu0
      %v443 = vpop.f32.mrf.mxu0
      %444 = vdwg.mxu0
      %v446 = vsel %vm397, %v395, 0
      %v449 = vsel %vm401, %v391, 0
      %451 = vmatprep.subr.bf16.mxu0 0
      %452 = vmatpush1.bf16.msra.mxu0 0
      %453 = vmatprep.subr.bf16.mxu0 0
      %454 = vmatpush1.bf16.msra.mxu0 0
      %455 = vmatprep.subr.bf16.mxu0 0
      %456 = vmatpush1.bf16.msra.mxu0 0
      %457 = vmatprep.subr.bf16.mxu0 0
      %458 = vmatpush1.bf16.msra.mxu0 0
      %459 = vmatprep.subr.bf16.mxu0 0
      %460 = vmatpush1.bf16.msra.mxu0 0
      %461 = vmatprep.subr.bf16.mxu0 0
      %462 = vmatpush1.bf16.msra.mxu0 0
      %463 = vmatprep.subr.bf16.mxu0 0
      %464 = vmatpush1.bf16.msra.mxu0 0
      %465 = vmatprep.subr.bf16.mxu0 0
      %466 = vmatpush1.bf16.msra.mxu0 %v449
      %467 = vmatprep.subr.bf16.mxu0 0
      %468 = vmatpush2.bf16.msra.mxu0 0
      %469 = vmatprep.subr.bf16.mxu0 0
      %470 = vmatpush2.bf16.msra.mxu0 0
      %471 = vmatprep.subr.bf16.mxu0 0
      %472 = vmatpush2.bf16.msra.mxu0 0
      %473 = vmatprep.subr.bf16.mxu0 0
      %474 = vmatpush2.bf16.msra.mxu0 0
      %475 = vmatprep.subr.bf16.mxu0 0
      %476 = vmatpush2.bf16.msra.mxu0 0
      %477 = vmatprep.subr.bf16.mxu0 0
      %478 = vmatpush2.bf16.msra.mxu0 0
      %479 = vmatprep.subr.bf16.mxu0 0
      %480 = vmatpush2.bf16.msra.mxu0 0
      %481 = vmatprep.subr.bf16.mxu0 0
      %482 = vmatpush2.bf16.msra.mxu0 0
      %483 = vmatprep.mubr.bf16.mxu0 0
      %484 = vmatmul.mubr.bf16.gmra.mxu0 %v446
      %v485 = vpop.f32.mrf.mxu0
      %v486 = vadd.f32 %v440, %v485
      %v487 = vpop.f32.mrf.mxu0
      %v488 = vpop.f32.mrf.mxu0
      %v489 = vpop.f32.mrf.mxu0
      %490 = vdwg.mxu0
      %s491 = scalar_lea.vmem %s4, 4
      %v492 = vld [vmem:[%s491] sm:$0xf]
      %495 = vrot.lane.b32.xlu0 %v391, 127
      %v496 = vpop.permute.xlu0 %495
      %497 = vrot.lane.b32.xlu0 %v392, 127
      %v498 = vpop.permute.xlu0 %497
      %vm499 = vcmask 1039360
      %v500 = vsel %vm499, %v496, %v498
      %v502 = vsel %vm397, %v492, 0
      %v505 = vsel %vm401, %v500, 0
      %507 = vmatprep.subr.bf16.mxu0 0
      %508 = vmatpush1.bf16.msra.mxu0 0
      %509 = vmatprep.subr.bf16.mxu0 0
      %510 = vmatpush1.bf16.msra.mxu0 0
      %511 = vmatprep.subr.bf16.mxu0 0
      %512 = vmatpush1.bf16.msra.mxu0 0
      %513 = vmatprep.subr.bf16.mxu0 0
      %514 = vmatpush1.bf16.msra.mxu0 0
      %515 = vmatprep.subr.bf16.mxu0 0
      %516 = vmatpush1.bf16.msra.mxu0 0
      %517 = vmatprep.subr.bf16.mxu0 0
      %518 = vmatpush1.bf16.msra.mxu0 0
      %519 = vmatprep.subr.bf16.mxu0 0
      %520 = vmatpush1.bf16.msra.mxu0 0
      %521 = vmatprep.subr.bf16.mxu0 0
      %522 = vmatpush1.bf16.msra.mxu0 %v505
      %523 = vmatprep.subr.bf16.mxu0 0
      %524 = vmatpush2.bf16.msra.mxu0 0
      %525 = vmatprep.subr.bf16.mxu0 0
      %526 = vmatpush2.bf16.msra.mxu0 0
      %527 = vmatprep.subr.bf16.mxu0 0
      %528 = vmatpush2.bf16.msra.mxu0 0
      %529 = vmatprep.subr.bf16.mxu0 0
      %530 = vmatpush2.bf16.msra.mxu0 0
      %531 = vmatprep.subr.bf16.mxu0 0
      %532 = vmatpush2.bf16.msra.mxu0 0
      %533 = vmatprep.subr.bf16.mxu0 0
      %534 = vmatpush2.bf16.msra.mxu0 0
      %535 = vmatprep.subr.bf16.mxu0 0
      %536 = vmatpush2.bf16.msra.mxu0 0
      %537 = vmatprep.subr.bf16.mxu0 0
      %538 = vmatpush2.bf16.msra.mxu0 0
      %539 = vmatprep.mubr.bf16.mxu0 0
      %540 = vmatmul.mubr.bf16.gmra.mxu0 %v502
      %v541 = vpop.f32.mrf.mxu0
      %v542 = vadd.f32 0.0, %v541
      %v543 = vpop.f32.mrf.mxu0
      %v544 = vpop.f32.mrf.mxu0
      %v545 = vpop.f32.mrf.mxu0
      %546 = vdwg.mxu0
      %v547 = vadd.f32 %v486, %v542
      %s548 = scalar_lea.vmem %s5, 4
      %v549 = vld [vmem:[%s548] sm:$0xf]
      %552 = vrot.lane.b32.xlu0 %v393, 127
      %v553 = vpop.permute.xlu0 %552
      %554 = vrot.lane.b32.xlu0 %v394, 127
      %v555 = vpop.permute.xlu0 %554
      %v556 = vsel %vm499, %v553, %v555
      %v558 = vsel %vm397, %v549, 0
      %v561 = vsel %vm401, %v556, 0
      %563 = vmatprep.subr.bf16.mxu0 0
      %564 = vmatpush1.bf16.msra.mxu0 0
      %565 = vmatprep.subr.bf16.mxu0 0
      %566 = vmatpush1.bf16.msra.mxu0 0
      %567 = vmatprep.subr.bf16.mxu0 0
      %568 = vmatpush1.bf16.msra.mxu0 0
      %569 = vmatprep.subr.bf16.mxu0 0
      %570 = vmatpush1.bf16.msra.mxu0 0
      %571 = vmatprep.subr.bf16.mxu0 0
      %572 = vmatpush1.bf16.msra.mxu0 0
      %573 = vmatprep.subr.bf16.mxu0 0
      %574 = vmatpush1.bf16.msra.mxu0 0
      %575 = vmatprep.subr.bf16.mxu0 0
      %576 = vmatpush1.bf16.msra.mxu0 0
      %577 = vmatprep.subr.bf16.mxu0 0
      %578 = vmatpush1.bf16.msra.mxu0 %v561
      %579 = vmatprep.subr.bf16.mxu0 0
      %580 = vmatpush2.bf16.msra.mxu0 0
      %581 = vmatprep.subr.bf16.mxu0 0
      %582 = vmatpush2.bf16.msra.mxu0 0
      %583 = vmatprep.subr.bf16.mxu0 0
      %584 = vmatpush2.bf16.msra.mxu0 0
      %585 = vmatprep.subr.bf16.mxu0 0
      %586 = vmatpush2.bf16.msra.mxu0 0
      %587 = vmatprep.subr.bf16.mxu0 0
      %588 = vmatpush2.bf16.msra.mxu0 0
      %589 = vmatprep.subr.bf16.mxu0 0
      %590 = vmatpush2.bf16.msra.mxu0 0
      %591 = vmatprep.subr.bf16.mxu0 0
      %592 = vmatpush2.bf16.msra.mxu0 0
      %593 = vmatprep.subr.bf16.mxu0 0
      %594 = vmatpush2.bf16.msra.mxu0 0
      %595 = vmatprep.mubr.bf16.mxu0 0
      %596 = vmatmul.mubr.bf16.gmra.mxu0 %v558
      %v597 = vpop.f32.mrf.mxu0
      %v598 = vadd.f32 0.0, %v597
      %v599 = vpop.f32.mrf.mxu0
      %v600 = vpop.f32.mrf.mxu0
      %v601 = vpop.f32.mrf.mxu0
      %602 = vdwg.mxu0
      %v603 = vadd.f32 %v547, %v598
      %s604 = scalar_lea.vmem %s4, 8
      %v605 = vld [vmem:[%s604] sm:$0xf]
      %606 = vrot.lane.b32.xlu0 %v391, 126
      %v607 = vpop.permute.xlu0 %606
      %608 = vrot.lane.b32.xlu0 %v392, 126
      %v609 = vpop.permute.xlu0 %608
      %vm610 = vcmask 1031168
      %v611 = vsel %vm610, %v607, %v609
      %v613 = vsel %vm397, %v605, 0
      %v616 = vsel %vm401, %v611, 0
      %618 = vmatprep.subr.bf16.mxu0 0
      %619 = vmatpush1.bf16.msra.mxu0 0
      %620 = vmatprep.subr.bf16.mxu0 0
      %621 = vmatpush1.bf16.msra.mxu0 0
      %622 = vmatprep.subr.bf16.mxu0 0
      %623 = vmatpush1.bf16.msra.mxu0 0
      %624 = vmatprep.subr.bf16.mxu0 0
      %625 = vmatpush1.bf16.msra.mxu0 0
      %626 = vmatprep.subr.bf16.mxu0 0
      %627 = vmatpush1.bf16.msra.mxu0 0
      %628 = vmatprep.subr.bf16.mxu0 0
      %629 = vmatpush1.bf16.msra.mxu0 0
      %630 = vmatprep.subr.bf16.mxu0 0
      %631 = vmatpush1.bf16.msra.mxu0 0
      %632 = vmatprep.subr.bf16.mxu0 0
      %633 = vmatpush1.bf16.msra.mxu0 %v616
      %634 = vmatprep.subr.bf16.mxu0 0
      %635 = vmatpush2.bf16.msra.mxu0 0
      %636 = vmatprep.subr.bf16.mxu0 0
      %637 = vmatpush2.bf16.msra.mxu0 0
      %638 = vmatprep.subr.bf16.mxu0 0
      %639 = vmatpush2.bf16.msra.mxu0 0
      %640 = vmatprep.subr.bf16.mxu0 0
      %641 = vmatpush2.bf16.msra.mxu0 0
      %642 = vmatprep.subr.bf16.mxu0 0
      %643 = vmatpush2.bf16.msra.mxu0 0
      %644 = vmatprep.subr.bf16.mxu0 0
      %645 = vmatpush2.bf16.msra.mxu0 0
      %646 = vmatprep.subr.bf16.mxu0 0
      %647 = vmatpush2.bf16.msra.mxu0 0
      %648 = vmatprep.subr.bf16.mxu0 0
      %649 = vmatpush2.bf16.msra.mxu0 0
      %650 = vmatprep.mubr.bf16.mxu0 0
      %651 = vmatmul.mubr.bf16.gmra.mxu0 %v613
      %v652 = vpop.f32.mrf.mxu0
      %v653 = vadd.f32 0.0, %v652
      %v654 = vpop.f32.mrf.mxu0
      %v655 = vpop.f32.mrf.mxu0
      %v656 = vpop.f32.mrf.mxu0
      %657 = vdwg.mxu0
      %v658 = vadd.f32 %v603, %v653
      %s659 = scalar_lea.vmem %s5, 8
      %v660 = vld [vmem:[%s659] sm:$0xf]
      %661 = vrot.lane.b32.xlu0 %v393, 126
      %v662 = vpop.permute.xlu0 %661
      %663 = vrot.lane.b32.xlu0 %v394, 126
      %v664 = vpop.permute.xlu0 %663
      %v665 = vsel %vm610, %v662, %v664
      %v667 = vsel %vm397, %v660, 0
      %v670 = vsel %vm401, %v665, 0
      %672 = vmatprep.subr.bf16.mxu0 0
      %673 = vmatpush1.bf16.msra.mxu0 0
      %674 = vmatprep.subr.bf16.mxu0 0
      %675 = vmatpush1.bf16.msra.mxu0 0
      %676 = vmatprep.subr.bf16.mxu0 0
      %677 = vmatpush1.bf16.msra.mxu0 0
      %678 = vmatprep.subr.bf16.mxu0 0
      %679 = vmatpush1.bf16.msra.mxu0 0
      %680 = vmatprep.subr.bf16.mxu0 0
      %681 = vmatpush1.bf16.msra.mxu0 0
      %682 = vmatprep.subr.bf16.mxu0 0
      %683 = vmatpush1.bf16.msra.mxu0 0
      %684 = vmatprep.subr.bf16.mxu0 0
      %685 = vmatpush1.bf16.msra.mxu0 0
      %686 = vmatprep.subr.bf16.mxu0 0
      %687 = vmatpush1.bf16.msra.mxu0 %v670
      %688 = vmatprep.subr.bf16.mxu0 0
      %689 = vmatpush2.bf16.msra.mxu0 0
      %690 = vmatprep.subr.bf16.mxu0 0
      %691 = vmatpush2.bf16.msra.mxu0 0
      %692 = vmatprep.subr.bf16.mxu0 0
      %693 = vmatpush2.bf16.msra.mxu0 0
      %694 = vmatprep.subr.bf16.mxu0 0
      %695 = vmatpush2.bf16.msra.mxu0 0
      %696 = vmatprep.subr.bf16.mxu0 0
      %697 = vmatpush2.bf16.msra.mxu0 0
      %698 = vmatprep.subr.bf16.mxu0 0
      %699 = vmatpush2.bf16.msra.mxu0 0
      %700 = vmatprep.subr.bf16.mxu0 0
      %701 = vmatpush2.bf16.msra.mxu0 0
      %702 = vmatprep.subr.bf16.mxu0 0
      %703 = vmatpush2.bf16.msra.mxu0 0
      %704 = vmatprep.mubr.bf16.mxu0 0
      %705 = vmatmul.mubr.bf16.gmra.mxu0 %v667
      %v706 = vpop.f32.mrf.mxu0
      %v707 = vadd.f32 0.0, %v706
      %v708 = vpop.f32.mrf.mxu0
      %v709 = vpop.f32.mrf.mxu0
      %v710 = vpop.f32.mrf.mxu0
      %711 = vdwg.mxu0
      %v712 = vadd.f32 %v658, %v707
      %s713 = scalar_lea.vmem %s4, 12
      %v714 = vld [vmem:[%s713] sm:$0xf]
      %715 = vrot.lane.b32.xlu0 %v391, 125
      %v716 = vpop.permute.xlu0 %715
      %717 = vrot.lane.b32.xlu0 %v392, 125
      %v718 = vpop.permute.xlu0 %717
      %vm719 = vcmask 1022976
      %v720 = vsel %vm719, %v716, %v718
      %v722 = vsel %vm397, %v714, 0
      %v725 = vsel %vm401, %v720, 0
      %727 = vmatprep.subr.bf16.mxu0 0
      %728 = vmatpush1.bf16.msra.mxu0 0
      %729 = vmatprep.subr.bf16.mxu0 0
      %730 = vmatpush1.bf16.msra.mxu0 0
      %731 = vmatprep.subr.bf16.mxu0 0
      %732 = vmatpush1.bf16.msra.mxu0 0
      %733 = vmatprep.subr.bf16.mxu0 0
      %734 = vmatpush1.bf16.msra.mxu0 0
      %735 = vmatprep.subr.bf16.mxu0 0
      %736 = vmatpush1.bf16.msra.mxu0 0
      %737 = vmatprep.subr.bf16.mxu0 0
      %738 = vmatpush1.bf16.msra.mxu0 0
      %739 = vmatprep.subr.bf16.mxu0 0
      %740 = vmatpush1.bf16.msra.mxu0 0
      %741 = vmatprep.subr.bf16.mxu0 0
      %742 = vmatpush1.bf16.msra.mxu0 %v725
      %743 = vmatprep.subr.bf16.mxu0 0
      %744 = vmatpush2.bf16.msra.mxu0 0
      %745 = vmatprep.subr.bf16.mxu0 0
      %746 = vmatpush2.bf16.msra.mxu0 0
      %747 = vmatprep.subr.bf16.mxu0 0
      %748 = vmatpush2.bf16.msra.mxu0 0
      %749 = vmatprep.subr.bf16.mxu0 0
      %750 = vmatpush2.bf16.msra.mxu0 0
      %751 = vmatprep.subr.bf16.mxu0 0
      %752 = vmatpush2.bf16.msra.mxu0 0
      %753 = vmatprep.subr.bf16.mxu0 0
      %754 = vmatpush2.bf16.msra.mxu0 0
      %755 = vmatprep.subr.bf16.mxu0 0
      %756 = vmatpush2.bf16.msra.mxu0 0
      %757 = vmatprep.subr.bf16.mxu0 0
      %758 = vmatpush2.bf16.msra.mxu0 0
      %759 = vmatprep.mubr.bf16.mxu0 0
      %760 = vmatmul.mubr.bf16.gmra.mxu0 %v722
      %v761 = vpop.f32.mrf.mxu0
      %v762 = vadd.f32 0.0, %v761
      %v763 = vpop.f32.mrf.mxu0
      %v764 = vpop.f32.mrf.mxu0
      %v765 = vpop.f32.mrf.mxu0
      %766 = vdwg.mxu0
      %v767 = vadd.f32 %v712, %v762
      %s768 = scalar_lea.vmem %s5, 12
      %v769 = vld [vmem:[%s768] sm:$0xf]
      %770 = vrot.lane.b32.xlu0 %v393, 125
      %v771 = vpop.permute.xlu0 %770
      %772 = vrot.lane.b32.xlu0 %v394, 125
      %v773 = vpop.permute.xlu0 %772
      %v774 = vsel %vm719, %v771, %v773
      %v776 = vsel %vm397, %v769, 0
      %v779 = vsel %vm401, %v774, 0
      %781 = vmatprep.subr.bf16.mxu0 0
      %782 = vmatpush1.bf16.msra.mxu0 0
      %783 = vmatprep.subr.bf16.mxu0 0
      %784 = vmatpush1.bf16.msra.mxu0 0
      %785 = vmatprep.subr.bf16.mxu0 0
      %786 = vmatpush1.bf16.msra.mxu0 0
      %787 = vmatprep.subr.bf16.mxu0 0
      %788 = vmatpush1.bf16.msra.mxu0 0
      %789 = vmatprep.subr.bf16.mxu0 0
      %790 = vmatpush1.bf16.msra.mxu0 0
      %791 = vmatprep.subr.bf16.mxu0 0
      %792 = vmatpush1.bf16.msra.mxu0 0
      %793 = vmatprep.subr.bf16.mxu0 0
      %794 = vmatpush1.bf16.msra.mxu0 0
      %795 = vmatprep.subr.bf16.mxu0 0
      %796 = vmatpush1.bf16.msra.mxu0 %v779
      %797 = vmatprep.subr.bf16.mxu0 0
      %798 = vmatpush2.bf16.msra.mxu0 0
      %799 = vmatprep.subr.bf16.mxu0 0
      %800 = vmatpush2.bf16.msra.mxu0 0
      %801 = vmatprep.subr.bf16.mxu0 0
      %802 = vmatpush2.bf16.msra.mxu0 0
      %803 = vmatprep.subr.bf16.mxu0 0
      %804 = vmatpush2.bf16.msra.mxu0 0
      %805 = vmatprep.subr.bf16.mxu0 0
      %806 = vmatpush2.bf16.msra.mxu0 0
      %807 = vmatprep.subr.bf16.mxu0 0
      %808 = vmatpush2.bf16.msra.mxu0 0
      %809 = vmatprep.subr.bf16.mxu0 0
      %810 = vmatpush2.bf16.msra.mxu0 0
      %811 = vmatprep.subr.bf16.mxu0 0
      %812 = vmatpush2.bf16.msra.mxu0 0
      %813 = vmatprep.mubr.bf16.mxu0 0
      %814 = vmatmul.mubr.bf16.gmra.mxu0 %v776
      %v815 = vpop.f32.mrf.mxu0
      %v816 = vadd.f32 0.0, %v815
      %v817 = vpop.f32.mrf.mxu0
      %v818 = vpop.f32.mrf.mxu0
      %v819 = vpop.f32.mrf.mxu0
      %820 = vdwg.mxu0
      %v821 = vadd.f32 %v767, %v816
      %s822 = scalar_lea.vmem %s4, 16
      %v823 = vld [vmem:[%s822] sm:$0xf]
      %824 = vrot.lane.b32.xlu0 %v391, 124
      %v825 = vpop.permute.xlu0 %824
      %826 = vrot.lane.b32.xlu0 %v392, 124
      %v827 = vpop.permute.xlu0 %826
      %vm828 = vcmask 1014784
      %v829 = vsel %vm828, %v825, %v827
      %v831 = vsel %vm397, %v823, 0
      %v834 = vsel %vm401, %v829, 0
      %836 = vmatprep.subr.bf16.mxu0 0
      %837 = vmatpush1.bf16.msra.mxu0 0
      %838 = vmatprep.subr.bf16.mxu0 0
      %839 = vmatpush1.bf16.msra.mxu0 0
      %840 = vmatprep.subr.bf16.mxu0 0
      %841 = vmatpush1.bf16.msra.mxu0 0
      %842 = vmatprep.subr.bf16.mxu0 0
      %843 = vmatpush1.bf16.msra.mxu0 0
      %844 = vmatprep.subr.bf16.mxu0 0
      %845 = vmatpush1.bf16.msra.mxu0 0
      %846 = vmatprep.subr.bf16.mxu0 0
      %847 = vmatpush1.bf16.msra.mxu0 0
      %848 = vmatprep.subr.bf16.mxu0 0
      %849 = vmatpush1.bf16.msra.mxu0 0
      %850 = vmatprep.subr.bf16.mxu0 0
      %851 = vmatpush1.bf16.msra.mxu0 %v834
      %852 = vmatprep.subr.bf16.mxu0 0
      %853 = vmatpush2.bf16.msra.mxu0 0
      %854 = vmatprep.subr.bf16.mxu0 0
      %855 = vmatpush2.bf16.msra.mxu0 0
      %856 = vmatprep.subr.bf16.mxu0 0
      %857 = vmatpush2.bf16.msra.mxu0 0
      %858 = vmatprep.subr.bf16.mxu0 0
      %859 = vmatpush2.bf16.msra.mxu0 0
      %860 = vmatprep.subr.bf16.mxu0 0
      %861 = vmatpush2.bf16.msra.mxu0 0
      %862 = vmatprep.subr.bf16.mxu0 0
      %863 = vmatpush2.bf16.msra.mxu0 0
      %864 = vmatprep.subr.bf16.mxu0 0
      %865 = vmatpush2.bf16.msra.mxu0 0
      %866 = vmatprep.subr.bf16.mxu0 0
      %867 = vmatpush2.bf16.msra.mxu0 0
      %868 = vmatprep.mubr.bf16.mxu0 0
      %869 = vmatmul.mubr.bf16.gmra.mxu0 %v831
      %v870 = vpop.f32.mrf.mxu0
      %v871 = vadd.f32 0.0, %v870
      %v872 = vpop.f32.mrf.mxu0
      %v873 = vpop.f32.mrf.mxu0
      %v874 = vpop.f32.mrf.mxu0
      %875 = vdwg.mxu0
      %v876 = vadd.f32 %v821, %v871
      %s877 = scalar_lea.vmem %s5, 16
      %v878 = vld [vmem:[%s877] sm:$0xf]
      %879 = vrot.lane.b32.xlu0 %v393, 124
      %v880 = vpop.permute.xlu0 %879
      %881 = vrot.lane.b32.xlu0 %v394, 124
      %v882 = vpop.permute.xlu0 %881
      %v883 = vsel %vm828, %v880, %v882
      %v885 = vsel %vm397, %v878, 0
      %v888 = vsel %vm401, %v883, 0
      %890 = vmatprep.subr.bf16.mxu0 0
      %891 = vmatpush1.bf16.msra.mxu0 0
      %892 = vmatprep.subr.bf16.mxu0 0
      %893 = vmatpush1.bf16.msra.mxu0 0
      %894 = vmatprep.subr.bf16.mxu0 0
      %895 = vmatpush1.bf16.msra.mxu0 0
      %896 = vmatprep.subr.bf16.mxu0 0
      %897 = vmatpush1.bf16.msra.mxu0 0
      %898 = vmatprep.subr.bf16.mxu0 0
      %899 = vmatpush1.bf16.msra.mxu0 0
      %900 = vmatprep.subr.bf16.mxu0 0
      %901 = vmatpush1.bf16.msra.mxu0 0
      %902 = vmatprep.subr.bf16.mxu0 0
      %903 = vmatpush1.bf16.msra.mxu0 0
      %904 = vmatprep.subr.bf16.mxu0 0
      %905 = vmatpush1.bf16.msra.mxu0 %v888
      %906 = vmatprep.subr.bf16.mxu0 0
      %907 = vmatpush2.bf16.msra.mxu0 0
      %908 = vmatprep.subr.bf16.mxu0 0
      %909 = vmatpush2.bf16.msra.mxu0 0
      %910 = vmatprep.subr.bf16.mxu0 0
      %911 = vmatpush2.bf16.msra.mxu0 0
      %912 = vmatprep.subr.bf16.mxu0 0
      %913 = vmatpush2.bf16.msra.mxu0 0
      %914 = vmatprep.subr.bf16.mxu0 0
      %915 = vmatpush2.bf16.msra.mxu0 0
      %916 = vmatprep.subr.bf16.mxu0 0
      %917 = vmatpush2.bf16.msra.mxu0 0
      %918 = vmatprep.subr.bf16.mxu0 0
      %919 = vmatpush2.bf16.msra.mxu0 0
      %920 = vmatprep.subr.bf16.mxu0 0
      %921 = vmatpush2.bf16.msra.mxu0 0
      %922 = vmatprep.mubr.bf16.mxu0 0
      %923 = vmatmul.mubr.bf16.gmra.mxu0 %v885
      %v924 = vpop.f32.mrf.mxu0
      %v925 = vadd.f32 0.0, %v924
      %v926 = vpop.f32.mrf.mxu0
      %v927 = vpop.f32.mrf.mxu0
      %v928 = vpop.f32.mrf.mxu0
      %929 = vdwg.mxu0
      %v930 = vadd.f32 %v876, %v925
      %s931 = smul.u32 %s22, 128
      %v932 = vlaneseq
      %v933 = vand.u32 %v932, 127
      %v934 = vstv %s931
      %v935 = vadd.s32 %v934, %v933
      %vm936 = vcmp.lt.s32.totalorder %v935, 156
      %v937 = vsel %vm936, %v930, 0.0
      %938 = vadd.xlane.f32.xlu0 %v937
      %v939 = vpop.xlane.xlu0 %938
      %v940 = vmul.f32 %v937, %v937
      %941 = vadd.xlane.f32.xlu0 %v940
      %v942 = vpop.xlane.xlu0 %941
      %vm943 = vcmask 7168
      %v944 = vsel %vm943, %v939, %v942
      %vm945 = vcmask 15360
      %946 = vst.msk [vmem:[%s389] sm:$0xff] %vm945, %v944
      %p947 = scmp.lt.s32.totalorder %s21, 1
      %s948 = scalar_select %p947, %s21, 1
      %p949 = scmp.lt.s32.totalorder %s22, 1
      %s950 = scalar_select %p949, %s22, 1
      %s951 = smul.addr %s948, 2
      %s952 = sadd.s32 %s950, %s951
      %s953 = smul.addr %s952, 8
      %s954 = scalar_lea.vmem %s6, %s953
      // Predicated region
      $region45: #{upsample_block.2} parent=43 // pred_check
        %p955 = pneg %p207
      $region46: #{upsample_block.2} parent=43 // pred_check_branch
        %957 = sbr.rel (%p955) target = $region48
      $region47: #{upsample_block.2} parent=43 // pred_region
        _
      $region48: #{upsample_block.2} parent=43 // pred_fallthru
        _
    $region44: #{upsample_block.2} parent=5 // pred_fallthru
      _
    %p958 = scmp.le.s32.totalorder 2, %s12
    // Predicated region
    $region49: #{upsample_block.2} parent=5 // pred_check
      %p959 = pneg %p958
    $region50: #{upsample_block.2} parent=5 // pred_check_branch
      %961 = sbr.rel (%p959) target = $region52
    $region51: #{upsample_block.2} parent=5 // pred_region
      %s962 = ssub.s32 %s12, 2
      // Predicated region
      $region53: #{upsample_block.2} parent=51 // pred_check
        %p963 = pneg %p213
      $region54: #{upsample_block.2} parent=51 // pred_check_branch
        %965 = sbr.rel (%p963) target = $region56
      $region55: #{upsample_block.2} parent=51 // pred_region
        %p966 = scmp.lt.s32.totalorder %s23, 1
        %s967 = scalar_select %p966, %s23, 1
        %p968 = scmp.lt.s32.totalorder %s24, 1
        %s969 = scalar_select %p968, %s24, 1
        %s970 = smul.addr %s967, 2
        %s971 = sadd.s32 %s969, %s970
        %s972 = smul.addr %s971, 8
        %s973 = scalar_lea.vmem %s6, %s972
      $region56: #{upsample_block.2} parent=51 // pred_fallthru
        _
    $region52: #{upsample_block.2} parent=5 // pred_fallthru
      _
  $region6: #{upsample_block.2} parent=0 // loop_footer
    %s16 = sadd.s32 1, %s12
  $region7: #{upsample_block.2} parent=0 // loop_footer_branch
    %11 = sbr.rel target = $region3
  $region8: #{upsample_block.2} parent=0 // loop_exit
    _

</llo_original>
